<compile_context>
chip_gen: v7x
topology: tpu7x:2x2x1
jax: 0.10.0
libtpu: 0.0.40
codegen_flags: <defaults>
</compile_context>

<pallas_src>
import math

import numpy as np
import jax
import jax.numpy as jnp
from jax.experimental import pallas as pl
from jax.experimental.pallas import tpu as pltpu

# ------------------------- model configuration -----------------------------
NFEAT = 32
HIDDEN = 32                      # hidden % (num_heads * 4) == 0
SRC_KEYS = ("s0", "s1")
DST_KEYS = ("d0", "d1")
SRC_DATA_SIZE = {"s0": 32, "s1": 16}   # "s1" != nfeat -> gets an embedding Linear
DST_DATA_SIZE = {"d0": 32, "d1": 32}


def _l2norm(x, eps=1e-12):
    # F.normalize(x, p=2, dim=-1)  (reference / host side)
    return x / jnp.maximum(jnp.sqrt(jnp.sum(x * x, axis=-1, keepdims=True)), eps)


# ----------------------------- fused kernel --------------------------------
def _fused_kernel(x_ref, w1_ref, b1_ref, w2_ref, b2_ref, wbig_ref, bbig_ref,
                  bo_ref, r8bc_ref, eys_ref, eas_ref, eyd_ref, ead_ref,
                  r16_ref, wout_ref, scal_ref, o_ref):
    f32 = jnp.float32
    bf16 = jnp.bfloat16
    cf = x_ref.shape[1]                       # num_feats * hidden = 128

    a1 = scal_ref[0]
    a2 = scal_ref[1]
    gamma = scal_ref[2]
    b_out = scal_ref[3]

    def l2n_blocks(z):
        # Vectorized per-32-lane-channel L2 normalization: a block-ones matmul
        # broadcasts each channel's sum-of-squares back over its lanes.
        ssq = jnp.dot(z * z, bo_ref[...], preferred_element_type=f32)
        return z * jax.lax.rsqrt(jnp.maximum(ssq, 1e-24))

    # --- grouped Conv1d1x1 -> PReLU -> Conv1d1x1 (block-diag bf16 matmuls) ---
    x = x_ref[...]                                                   # (TB, 128) bf16
    y = jnp.dot(x, w1_ref[...], preferred_element_type=f32) + b1_ref[...]
    y = jnp.where(y >= 0.0, y, a1 * y)                               # PReLU #1
    y = jnp.dot(y.astype(bf16), w2_ref[...],
                preferred_element_type=f32) + b2_ref[...]

    # --- L2Norm + PReLU #2 (full-width, no per-channel loop) -----------------
    y = l2n_blocks(y)
    y = jnp.where(y >= 0.0, y, a2 * y)

    # --- fused block-diagonal QKV: one (TB,128)@(128,512) matmul -------------
    fgh = jnp.dot(y.astype(bf16), wbig_ref[...],
                  preferred_element_type=f32) + bbig_ref[...]        # (TB, 512)
    ff = fgh[:, 0 * cf:1 * cf]      # [f_c | f_c | zero pad]
    gg = fgh[:, 1 * cf:2 * cf]      # [g_c | g_swap(c) | zero pad]
    hh = fgh[:, 2 * cf:3 * cf]      # [h_c]
    hs = fgh[:, 3 * cf:4 * cf]      # [h_swap(c)]

    # --- 2x2 attention softmax (scores broadcast to 32-lane channel blocks) --
    sbc = jnp.dot(ff * gg, r8bc_ref[...], preferred_element_type=f32)  # (TB, 256)
    sd = sbc[:, 0:cf]               # s_{m,m}        (1/sqrt(cq) folded into Wq)
    so = sbc[:, cf:2 * cf]          # s_{m,other}
    mx = jnp.maximum(sd, so)
    ed = jnp.exp(sd - mx)
    eo = jnp.exp(so - mx)
    inv = pl.reciprocal(ed + eo, approx=True)                        # EUP slot
    att = gamma * ((ed * inv) * hh + (eo * inv) * hs)
    att = l2n_blocks(att)                                            # F.normalize

    # --- 16 pairwise link scores, lane-dense ----------------------------------
    s_big = (jnp.dot(y, eys_ref[...], preferred_element_type=f32) +
             jnp.dot(att, eas_ref[...], preferred_element_type=f32))  # (TB, 512)
    d_big = (jnp.dot(y, eyd_ref[...], preferred_element_type=f32) +
             jnp.dot(att, ead_ref[...], preferred_element_type=f32))  # (TB, 512)
    dots = jnp.dot(s_big * d_big, r16_ref[...],
                   preferred_element_type=f32)                        # (TB, 16)

    # --- tanh + lr_output (w_out padded to 8 lanes; col 0 = real score) ------
    o_ref[...] = jnp.dot(jnp.tanh(dots), wout_ref[...],
                         preferred_element_type=f32) + b_out


def fused_link_deep(x_slab, packed):
    bsz, cf = x_slab.shape

    # batch tiling: full-array block when small, 256-row parallel tiles when big
    b_pad = max(8, ((bsz + 7) // 8) * 8)
    tb = min(256, b_pad)
    b_pad = ((b_pad + tb - 1) // tb) * tb
    if b_pad != bsz:
        x_slab = jnp.pad(x_slab, ((0, b_pad - bsz), (0, 0)))
    x_slab = x_slab.astype(jnp.bfloat16)

    def resident(arr):
        return pl.BlockSpec(arr.shape, lambda i: (0,) * arr.ndim)

    smem = pl.BlockSpec(memory_space=pltpu.MemorySpace.SMEM)
    const_names = ("w1_bd", "b1", "w2_bd", "b2", "wbig", "bbig", "bo", "r8bc",
                   "eys", "eas", "eyd", "ead", "r16", "w_out")
    consts = [packed[k] for k in const_names]

    out = pl.pallas_call(
        _fused_kernel,
        out_shape=jax.ShapeDtypeStruct((b_pad, 8), jnp.float32),
        grid=(b_pad // tb,),
        in_specs=[pl.BlockSpec((tb, cf), lambda i: (i, 0))]
                 + [resident(a) for a in consts]
                 + [smem],
        out_specs=pl.BlockSpec((tb, 8), lambda i: (i, 0)),
        compiler_params=pltpu.CompilerParams(
            dimension_semantics=("parallel",)),
    )(x_slab, *consts, packed["scal"])
    return out[:bsz, 0]


# ------------------------- parameters (deterministic) ------------------------
def init_params(key):
    n_src, n_dst = len(SRC_KEYS), len(DST_KEYS)
    c = n_src + n_dst                            # num_feats
    num_scores = (2 * n_src) * (2 * n_dst)
    ks = iter(jax.random.split(key, 32))

    def nrm(shape, scale=0.1):
        return scale * jax.random.normal(next(ks), shape, dtype=jnp.float32)

    params = {"embed": {}}
    for k, v in {**SRC_DATA_SIZE, **DST_DATA_SIZE}.items():
        if v != NFEAT:
            params["embed"][k] = (nrm((v, NFEAT)), nrm((1, NFEAT), 0.05))
    params["w1"] = nrm((c, NFEAT, HIDDEN))
    params["b1"] = nrm((c, HIDDEN), 0.05)
    params["w2"] = nrm((c, HIDDEN, HIDDEN))
    params["b2"] = nrm((c, HIDDEN), 0.05)
    params["prelu"] = jnp.array([0.25, 0.25], dtype=jnp.float32)  # nn.PReLU defaults
    cq = HIDDEN // 4
    params["wq"], params["bq"] = nrm((HIDDEN, cq)), nrm((1, cq), 0.05)
    params["wk"], params["bk"] = nrm((HIDDEN, cq)), nrm((1, cq), 0.05)
    params["wv"], params["bv"] = nrm((HIDDEN, HIDDEN)), nrm((1, HIDDEN), 0.05)
    params["gamma"] = jnp.array([0.3], dtype=jnp.float32)  # non-zero for a non-degenerate test
    params["w_out"] = nrm((num_scores,))
    params["b_out"] = jnp.array([0.01], dtype=jnp.float32)
    return params


def pack_params(params):
    """One-time host-side repack of the module params into kernel-ready tensors."""
    n_src, n_dst = len(SRC_KEYS), len(DST_KEYS)
    # TODO(synk): the swap-partner packing below assumes 2 channels per group (M=2).
    assert n_src == 2 and n_dst == 2
    C = n_src + n_dst                       # 4
    H = HIDDEN                              # 32
    CQ = H // 4                             # 8
    CF = C * H                              # 128
    NP = (2 * n_src) * (2 * n_dst)          # 16
    scale = 1.0 / math.sqrt(CQ)

    w1 = np.asarray(params["w1"], np.float32)
    b1 = np.asarray(params["b1"], np.float32)
    w2 = np.asarray(params["w2"], np.float32)
    b2 = np.asarray(params["b2"], np.float32)
    wq = np.asarray(params["wq"], np.float32) * scale
    bq = np.asarray(params["bq"], np.float32)[0] * scale
    wk = np.asarray(params["wk"], np.float32)
    bk = np.asarray(params["bk"], np.float32)[0]
    wv = np.asarray(params["wv"], np.float32)
    bv = np.asarray(params["bv"], np.float32)[0]

    # block-diagonal grouped 1x1 convs
    w1_bd = np.zeros((CF, CF), np.float32)
    w2_bd = np.zeros((CF, CF), np.float32)
    for c in range(C):
        w1_bd[c*H:(c+1)*H, c*H:(c+1)*H] = w1[c]
        w2_bd[c*H:(c+1)*H, c*H:(c+1)*H] = w2[c]

    # fused block-diagonal QKV weight:
    #   out lanes [0:CF)    FF = [f_0..f_3 | f_0..f_3 | zero pad]
    #             [CF:2CF)  GG = [g_0..g_3 | g_sw0..g_sw3 | zero pad]
    #             [2CF:3CF) HH = [h_0..h_3]
    #             [3CF:4CF) HS = [h_sw0..h_sw3]
    swap = [1, 0, 3, 2]
    wbig = np.zeros((CF, 4 * CF), np.float32)
    bbig = np.zeros((1, 4 * CF), np.float32)
    for c in range(C):
        rows = slice(c * H, (c + 1) * H)
        rows_sw = slice(swap[c] * H, (swap[c] + 1) * H)
        wbig[rows, c*CQ:(c+1)*CQ] = wq                                  # F
        wbig[rows, C*CQ + c*CQ: C*CQ + (c+1)*CQ] = wq                   # F dup
        bbig[0, c*CQ:(c+1)*CQ] = bq
        bbig[0, C*CQ + c*CQ: C*CQ + (c+1)*CQ] = bq
        wbig[rows, CF + c*CQ: CF + (c+1)*CQ] = wk                       # G
        bbig[0, CF + c*CQ: CF + (c+1)*CQ] = bk
        wbig[rows_sw, CF + C*CQ + c*CQ: CF + C*CQ + (c+1)*CQ] = wk      # G swapped
        bbig[0, CF + C*CQ + c*CQ: CF + C*CQ + (c+1)*CQ] = bk
        wbig[rows, 2*CF + c*H: 2*CF + (c+1)*H] = wv                     # H
        bbig[0, 2*CF + c*H: 2*CF + (c+1)*H] = bv
        wbig[rows_sw, 3*CF + c*H: 3*CF + (c+1)*H] = wv                  # H swapped
        bbig[0, 3*CF + c*H: 3*CF + (c+1)*H] = bv

    # block-ones: broadcast per-channel sum-of-squares over its 32 lanes
    bo = np.zeros((CF, CF), np.float32)
    for c in range(C):
        bo[c*H:(c+1)*H, c*H:(c+1)*H] = 1.0

    # attention-score reduce + broadcast: f*g lanes [c*8,(c+1)*8) -> cols [c*32,..)
    r8bc = np.zeros((CF, 2 * CF), np.float32)
    for c in range(C):
        r8bc[c*CQ:(c+1)*CQ, c*H:(c+1)*H] = 1.0
        r8bc[C*CQ + c*CQ: C*CQ + (c+1)*CQ, CF + c*H: CF + (c+1)*H] = 1.0

    # link-score pair expansion / reduce matrices (pair p = cs*4 + nd, matching
    # the torch flatten(start_dim=1) of einsum('bch,bnh->bcn'))
    eye = np.eye(H, dtype=np.float32)
    eys = np.zeros((CF, NP * H), np.float32)
    eas = np.zeros((CF, NP * H), np.float32)
    eyd = np.zeros((CF, NP * H), np.float32)
    ead = np.zeros((CF, NP * H), np.float32)
    for cs in range(2 * n_src):             # src_cat channel [s0, s1, as0, as1]
        for nd in range(2 * n_dst):         # dst_cat channel [d0, d1, ad0, ad1]
            p = cs * (2 * n_dst) + nd
            col = slice(p * H, (p + 1) * H)
            if cs < n_src:
                eys[cs*H:(cs+1)*H, col] = eye
            else:
                eas[(cs-n_src)*H:(cs-n_src+1)*H, col] = eye
            if nd < n_dst:
                eyd[(n_src+nd)*H:(n_src+nd+1)*H, col] = eye
            else:
                ead[(n_src+nd-n_dst)*H:(n_src+nd-n_dst+1)*H, col] = eye
    r16 = np.zeros((NP * H, NP), np.float32)
    for p in range(NP):
        r16[p*H:(p+1)*H, p] = 1.0

    # lr_output weights padded to 8 lanes (column 0 is the real score)
    w_out = np.zeros((NP, 8), np.float32)
    w_out[:, 0] = np.asarray(params["w_out"], np.float32)

    prelu = np.asarray(params["prelu"], np.float32)
    scal = np.array([prelu[0], prelu[1],
                     float(np.asarray(params["gamma"])[0]),
                     float(np.asarray(params["b_out"])[0])], np.float32)

    bf16 = jnp.bfloat16
    return {
        "embed": params["embed"],
        "w1_bd": jnp.asarray(w1_bd, bf16), "b1": jnp.asarray(b1.reshape(1, CF)),
        "w2_bd": jnp.asarray(w2_bd, bf16), "b2": jnp.asarray(b2.reshape(1, CF)),
        "wbig": jnp.asarray(wbig, bf16), "bbig": jnp.asarray(bbig),
        "bo": jnp.asarray(bo), "r8bc": jnp.asarray(r8bc),
        "eys": jnp.asarray(eys), "eas": jnp.asarray(eas),
        "eyd": jnp.asarray(eyd), "ead": jnp.asarray(ead),
        "r16": jnp.asarray(r16), "w_out": jnp.asarray(w_out),
        "scal": jnp.asarray(scal),
    }


# ------------------------------ forward pass --------------------------------
def simple_link_deep_forward(packed, src_feats, dst_feats, batch_src_idx, batch_dst_idx):
    bsz = batch_dst_idx.shape[0]

    xs = []
    for k in SRC_KEYS:
        v = src_feats[k][batch_src_idx]                     # gather (glue)
        if k in packed["embed"]:
            w, b = packed["embed"][k]
            v = v @ w + b                                   # tiny; fuses with gather
        if v.shape[0] != bsz:                               # unsqueeze/expand/flatten
            v = jnp.repeat(v, 2, axis=0)
        xs.append(v)
    for k in DST_KEYS:
        v = dst_feats[k][batch_dst_idx]
        if k in packed["embed"]:
            w, b = packed["embed"][k]
            v = v @ w + b
        xs.append(v)

    # channel-major lane slab (B, C*nfeat) -- no transposes needed
    x_slab = jnp.concatenate(xs, axis=1).astype(jnp.float32)
    return fused_link_deep(x_slab, packed)


# --------------------------- pure-JAX reference ------------------------------
def reference_forward(params, src_feats, dst_feats, batch_src_idx, batch_dst_idx):
    bsz = batch_dst_idx.shape[0]
    n_src = len(SRC_KEYS)
    xs = []
    for k in SRC_KEYS:
        v = src_feats[k][batch_src_idx]
        if k in params["embed"]:
            w, b = params["embed"][k]
            v = v @ w + b
        if v.shape[0] != bsz:
            v = jnp.repeat(v, 2, axis=0)
        xs.append(v)
    for k in DST_KEYS:
        v = dst_feats[k][batch_dst_idx]
        if k in params["embed"]:
            w, b = params["embed"][k]
            v = v @ w + b
        xs.append(v)
    x = jnp.stack(xs, axis=1)

    a1, a2 = params["prelu"][0], params["prelu"][1]
    y = jnp.einsum("bcm,cmn->bcn", x, params["w1"]) + params["b1"][None]
    y = jnp.where(y >= 0, y, a1 * y)
    y = jnp.einsum("bcm,cmn->bcn", y, params["w2"]) + params["b2"][None]
    y = _l2norm(y)
    y = jnp.where(y >= 0, y, a2 * y)
    src_x, dst_x = y[:, :n_src, :], y[:, n_src:, :]

    def attn(z):
        f = z @ params["wq"] + params["bq"]
        g = z @ params["wk"] + params["bk"]
        h = z @ params["wv"] + params["bv"]
        s = jnp.einsum("bmd,bnd->bmn", f, g) / math.sqrt(f.shape[-1])
        beta = jax.nn.softmax(s, axis=-1)
        return _l2norm(params["gamma"][0] * jnp.einsum("bmn,bnd->bmd", beta, h))

    src_cat = jnp.concatenate([src_x, attn(src_x)], axis=1)
    dst_cat = jnp.concatenate([dst_x, attn(dst_x)], axis=1)
    scores = jnp.tanh(jnp.einsum("bch,bnh->bcn", src_cat, dst_cat).reshape(bsz, -1))
    return scores @ params["w_out"] + params["b_out"][0]


if __name__ == "__main__":
    key = jax.random.PRNGKey(0)
    k_param, k_s0, k_s1, k_d0, k_d1, k_si, k_di = jax.random.split(key, 7)
    params = init_params(k_param)
    packed = pack_params(params)          # one-time host-side repack

    n_src_nodes, n_dst_nodes, bsz = 10, 12, 8
    src_feats = {
        "s0": jax.random.normal(k_s0, (n_src_nodes, SRC_DATA_SIZE["s0"]), jnp.float32),
        "s1": jax.random.normal(k_s1, (n_src_nodes, SRC_DATA_SIZE["s1"]), jnp.float32),
    }
    dst_feats = {
        "d0": jax.random.normal(k_d0, (n_dst_nodes, DST_DATA_SIZE["d0"]), jnp.float32),
        "d1": jax.random.normal(k_d1, (n_dst_nodes, DST_DATA_SIZE["d1"]), jnp.float32),
    }
    batch_src_idx = jax.random.randint(k_si, (bsz // 2,), 0, n_src_nodes)  # expanded x2
    batch_dst_idx = jax.random.randint(k_di, (bsz,), 0, n_dst_nodes)

    out = jax.jit(simple_link_deep_forward)(packed, src_feats, dst_feats,
                                            batch_src_idx, batch_dst_idx)
    out = jax.block_until_ready(out)

    ref = reference_forward(params, src_feats, dst_feats, batch_src_idx, batch_dst_idx)
    assert out.shape == (bsz,), out.shape
    # tolerance accounts for bf16 matmul inputs + approx reciprocal in the softmax
    assert jnp.allclose(out, ref, atol=4e-2, rtol=4e-2), (out, ref)
    print("KERNEL_OK")
</pallas_src>

<mosaic_0001>
module attributes {stable_mosaic.version = 11 : i64} {
  func.func @_fused_kernel(%arg0: i32, %arg1: memref<8x128xbf16, #tpu.memory_space<vmem>>, %arg2: memref<128x128xbf16, #tpu.memory_space<vmem>>, %arg3: memref<1x128xf32, #tpu.memory_space<vmem>>, %arg4: memref<128x128xbf16, #tpu.memory_space<vmem>>, %arg5: memref<1x128xf32, #tpu.memory_space<vmem>>, %arg6: memref<128x512xbf16, #tpu.memory_space<vmem>>, %arg7: memref<1x512xf32, #tpu.memory_space<vmem>>, %arg8: memref<128x128xf32, #tpu.memory_space<vmem>>, %arg9: memref<128x256xf32, #tpu.memory_space<vmem>>, %arg10: memref<128x512xf32, #tpu.memory_space<vmem>>, %arg11: memref<128x512xf32, #tpu.memory_space<vmem>>, %arg12: memref<128x512xf32, #tpu.memory_space<vmem>>, %arg13: memref<128x512xf32, #tpu.memory_space<vmem>>, %arg14: memref<512x16xf32, #tpu.memory_space<vmem>>, %arg15: memref<16x8xf32, #tpu.memory_space<vmem>>, %arg16: memref<4xf32, #tpu.memory_space<smem>>, %arg17: memref<8x8xf32, #tpu.memory_space<vmem>>) attributes {dimension_semantics = [#tpu.dimension_semantics<parallel>], iteration_bounds = array<i64: 1>, scalar_prefetch = 0 : i64, scratch_operands = 0 : i64, tpu.core_type = #tpu.core_type<tc>, window_params = [{transform_indices = @transform_0, window_bounds = array<i64: 8, 128>}, {pipeline_mode = #tpu.pipeline_mode<synchronous>, transform_indices = @transform_1, window_bounds = array<i64: 128, 128>}, {pipeline_mode = #tpu.pipeline_mode<synchronous>, transform_indices = @transform_2, window_bounds = array<i64: 1, 128>}, {pipeline_mode = #tpu.pipeline_mode<synchronous>, transform_indices = @transform_3, window_bounds = array<i64: 128, 128>}, {pipeline_mode = #tpu.pipeline_mode<synchronous>, transform_indices = @transform_4, window_bounds = array<i64: 1, 128>}, {pipeline_mode = #tpu.pipeline_mode<synchronous>, transform_indices = @transform_5, window_bounds = array<i64: 128, 512>}, {pipeline_mode = #tpu.pipeline_mode<synchronous>, transform_indices = @transform_6, window_bounds = array<i64: 1, 512>}, {pipeline_mode = #tpu.pipeline_mode<synchronous>, transform_indices = @transform_7, window_bounds = array<i64: 128, 128>}, {pipeline_mode = #tpu.pipeline_mode<synchronous>, transform_indices = @transform_8, window_bounds = array<i64: 128, 256>}, {pipeline_mode = #tpu.pipeline_mode<synchronous>, transform_indices = @transform_9, window_bounds = array<i64: 128, 512>}, {pipeline_mode = #tpu.pipeline_mode<synchronous>, transform_indices = @transform_10, window_bounds = array<i64: 128, 512>}, {pipeline_mode = #tpu.pipeline_mode<synchronous>, transform_indices = @transform_11, window_bounds = array<i64: 128, 512>}, {pipeline_mode = #tpu.pipeline_mode<synchronous>, transform_indices = @transform_12, window_bounds = array<i64: 128, 512>}, {pipeline_mode = #tpu.pipeline_mode<synchronous>, transform_indices = @transform_13, window_bounds = array<i64: 512, 16>}, {pipeline_mode = #tpu.pipeline_mode<synchronous>, transform_indices = @transform_14, window_bounds = array<i64: 16, 8>}, {transform_indices = @transform_15, window_bounds = array<i64: 4>}, {transform_indices = @transform_16, window_bounds = array<i64: 8, 8>}]} {
    %c0 = arith.constant 0 : index
    %0 = memref.load %arg16[%c0] : memref<4xf32, #tpu.memory_space<smem>>
    %c1 = arith.constant 1 : index
    %1 = memref.load %arg16[%c1] : memref<4xf32, #tpu.memory_space<smem>>
    %c2 = arith.constant 2 : index
    %2 = memref.load %arg16[%c2] : memref<4xf32, #tpu.memory_space<smem>>
    %c3 = arith.constant 3 : index
    %3 = memref.load %arg16[%c3] : memref<4xf32, #tpu.memory_space<smem>>
    %c0_0 = arith.constant 0 : index
    %c0_1 = arith.constant 0 : index
    %4 = vector.load %arg1[%c0_0, %c0_1] : memref<8x128xbf16, #tpu.memory_space<vmem>>, vector<8x128xbf16>
    %c0_2 = arith.constant 0 : index
    %c0_3 = arith.constant 0 : index
    %5 = vector.load %arg2[%c0_2, %c0_3] : memref<128x128xbf16, #tpu.memory_space<vmem>>, vector<128x128xbf16>
    %cst = arith.constant dense<0.000000e+00> : vector<8x128xf32>
    %6 = tpu.matmul %4, %5, %cst {dimension_numbers = #tpu.dot_dimension_numbers<[1], [0], [0], [1], [0, 0, 1, 1], [], []>} : vector<8x128xbf16>, vector<128x128xbf16>, vector<8x128xf32> -> vector<8x128xf32>
    %c0_4 = arith.constant 0 : index
    %c0_5 = arith.constant 0 : index
    %7 = vector.load %arg3[%c0_4, %c0_5] : memref<1x128xf32, #tpu.memory_space<vmem>>, vector<1x128xf32>
    %8 = vector.broadcast %7 : vector<1x128xf32> to vector<8x128xf32>
    %9 = arith.addf %6, %8 : vector<8x128xf32>
    %cst_6 = arith.constant 0.000000e+00 : f32
    %10 = vector.broadcast %cst_6 : f32 to vector<8x128xf32>
    %11 = arith.cmpf oge, %9, %10 : vector<8x128xf32>
    %12 = vector.broadcast %0 : f32 to vector<8x128xf32>
    %13 = arith.mulf %12, %9 : vector<8x128xf32>
    %14 = arith.select %11, %9, %13 : vector<8x128xi1>, vector<8x128xf32>
    %15 = arith.truncf %14 : vector<8x128xf32> to vector<8x128xbf16>
    %c0_7 = arith.constant 0 : index
    %c0_8 = arith.constant 0 : index
    %16 = vector.load %arg4[%c0_7, %c0_8] : memref<128x128xbf16, #tpu.memory_space<vmem>>, vector<128x128xbf16>
    %cst_9 = arith.constant dense<0.000000e+00> : vector<8x128xf32>
    %17 = tpu.matmul %15, %16, %cst_9 {dimension_numbers = #tpu.dot_dimension_numbers<[1], [0], [0], [1], [0, 0, 1, 1], [], []>} : vector<8x128xbf16>, vector<128x128xbf16>, vector<8x128xf32> -> vector<8x128xf32>
    %c0_10 = arith.constant 0 : index
    %c0_11 = arith.constant 0 : index
    %18 = vector.load %arg5[%c0_10, %c0_11] : memref<1x128xf32, #tpu.memory_space<vmem>>, vector<1x128xf32>
    %19 = vector.broadcast %18 : vector<1x128xf32> to vector<8x128xf32>
    %20 = arith.addf %17, %19 : vector<8x128xf32>
    %21 = arith.mulf %20, %20 : vector<8x128xf32>
    %c0_12 = arith.constant 0 : index
    %c0_13 = arith.constant 0 : index
    %22 = vector.load %arg8[%c0_12, %c0_13] : memref<128x128xf32, #tpu.memory_space<vmem>>, vector<128x128xf32>
    %cst_14 = arith.constant dense<0.000000e+00> : vector<8x128xf32>
    %23 = tpu.matmul %21, %22, %cst_14 {dimension_numbers = #tpu.dot_dimension_numbers<[1], [0], [0], [1], [0, 0, 1, 1], [], []>} : vector<8x128xf32>, vector<128x128xf32>, vector<8x128xf32> -> vector<8x128xf32>
    %cst_15 = arith.constant 1.000000e-24 : f32
    %24 = vector.broadcast %cst_15 : f32 to vector<8x128xf32>
    %25 = arith.maximumf %23, %24 : vector<8x128xf32>
    %26 = math.rsqrt %25 : vector<8x128xf32>
    %27 = arith.mulf %20, %26 : vector<8x128xf32>
    %cst_16 = arith.constant 0.000000e+00 : f32
    %28 = vector.broadcast %cst_16 : f32 to vector<8x128xf32>
    %29 = arith.cmpf oge, %27, %28 : vector<8x128xf32>
    %30 = vector.broadcast %1 : f32 to vector<8x128xf32>
    %31 = arith.mulf %30, %27 : vector<8x128xf32>
    %32 = arith.select %29, %27, %31 : vector<8x128xi1>, vector<8x128xf32>
    %33 = arith.truncf %32 : vector<8x128xf32> to vector<8x128xbf16>
    %c0_17 = arith.constant 0 : index
    %c0_18 = arith.constant 0 : index
    %34 = vector.load %arg6[%c0_17, %c0_18] : memref<128x512xbf16, #tpu.memory_space<vmem>>, vector<128x512xbf16>
    %cst_19 = arith.constant dense<0.000000e+00> : vector<8x512xf32>
    %35 = tpu.matmul %33, %34, %cst_19 {dimension_numbers = #tpu.dot_dimension_numbers<[1], [0], [0], [1], [0, 0, 1, 1], [], []>} : vector<8x128xbf16>, vector<128x512xbf16>, vector<8x512xf32> -> vector<8x512xf32>
    %c0_20 = arith.constant 0 : index
    %c0_21 = arith.constant 0 : index
    %36 = vector.load %arg7[%c0_20, %c0_21] : memref<1x512xf32, #tpu.memory_space<vmem>>, vector<1x512xf32>
    %37 = vector.broadcast %36 : vector<1x512xf32> to vector<8x512xf32>
    %38 = arith.addf %35, %37 : vector<8x512xf32>
    %39 = vector.extract_strided_slice %38 {offsets = [0, 0], sizes = [8, 128], strides = [1, 1]} : vector<8x512xf32> to vector<8x128xf32>
    %40 = vector.extract_strided_slice %38 {offsets = [0, 128], sizes = [8, 128], strides = [1, 1]} : vector<8x512xf32> to vector<8x128xf32>
    %41 = vector.extract_strided_slice %38 {offsets = [0, 256], sizes = [8, 128], strides = [1, 1]} : vector<8x512xf32> to vector<8x128xf32>
    %42 = vector.extract_strided_slice %38 {offsets = [0, 384], sizes = [8, 128], strides = [1, 1]} : vector<8x512xf32> to vector<8x128xf32>
    %43 = arith.mulf %39, %40 : vector<8x128xf32>
    %c0_22 = arith.constant 0 : index
    %c0_23 = arith.constant 0 : index
    %44 = vector.load %arg9[%c0_22, %c0_23] : memref<128x256xf32, #tpu.memory_space<vmem>>, vector<128x256xf32>
    %cst_24 = arith.constant dense<0.000000e+00> : vector<8x256xf32>
    %45 = tpu.matmul %43, %44, %cst_24 {dimension_numbers = #tpu.dot_dimension_numbers<[1], [0], [0], [1], [0, 0, 1, 1], [], []>} : vector<8x128xf32>, vector<128x256xf32>, vector<8x256xf32> -> vector<8x256xf32>
    %46 = vector.extract_strided_slice %45 {offsets = [0, 0], sizes = [8, 128], strides = [1, 1]} : vector<8x256xf32> to vector<8x128xf32>
    %47 = vector.extract_strided_slice %45 {offsets = [0, 128], sizes = [8, 128], strides = [1, 1]} : vector<8x256xf32> to vector<8x128xf32>
    %48 = arith.maximumf %46, %47 : vector<8x128xf32>
    %49 = arith.subf %46, %48 : vector<8x128xf32>
    %50 = math.exp %49 : vector<8x128xf32>
    %51 = arith.subf %47, %48 : vector<8x128xf32>
    %52 = math.exp %51 : vector<8x128xf32>
    %53 = arith.addf %50, %52 : vector<8x128xf32>
    %54 = tpu.reciprocal %53 {approx = true} : vector<8x128xf32> -> vector<8x128xf32>
    %55 = arith.mulf %50, %54 : vector<8x128xf32>
    %56 = arith.mulf %55, %41 : vector<8x128xf32>
    %57 = arith.mulf %52, %54 : vector<8x128xf32>
    %58 = arith.mulf %57, %42 : vector<8x128xf32>
    %59 = arith.addf %56, %58 : vector<8x128xf32>
    %60 = vector.broadcast %2 : f32 to vector<8x128xf32>
    %61 = arith.mulf %60, %59 : vector<8x128xf32>
    %62 = arith.mulf %61, %61 : vector<8x128xf32>
    %c0_25 = arith.constant 0 : index
    %c0_26 = arith.constant 0 : index
    %63 = vector.load %arg8[%c0_25, %c0_26] : memref<128x128xf32, #tpu.memory_space<vmem>>, vector<128x128xf32>
    %cst_27 = arith.constant dense<0.000000e+00> : vector<8x128xf32>
    %64 = tpu.matmul %62, %63, %cst_27 {dimension_numbers = #tpu.dot_dimension_numbers<[1], [0], [0], [1], [0, 0, 1, 1], [], []>} : vector<8x128xf32>, vector<128x128xf32>, vector<8x128xf32> -> vector<8x128xf32>
    %cst_28 = arith.constant 1.000000e-24 : f32
    %65 = vector.broadcast %cst_28 : f32 to vector<8x128xf32>
    %66 = arith.maximumf %64, %65 : vector<8x128xf32>
    %67 = math.rsqrt %66 : vector<8x128xf32>
    %68 = arith.mulf %61, %67 : vector<8x128xf32>
    %c0_29 = arith.constant 0 : index
    %c0_30 = arith.constant 0 : index
    %69 = vector.load %arg10[%c0_29, %c0_30] : memref<128x512xf32, #tpu.memory_space<vmem>>, vector<128x512xf32>
    %cst_31 = arith.constant dense<0.000000e+00> : vector<8x512xf32>
    %70 = tpu.matmul %32, %69, %cst_31 {dimension_numbers = #tpu.dot_dimension_numbers<[1], [0], [0], [1], [0, 0, 1, 1], [], []>} : vector<8x128xf32>, vector<128x512xf32>, vector<8x512xf32> -> vector<8x512xf32>
    %c0_32 = arith.constant 0 : index
    %c0_33 = arith.constant 0 : index
    %71 = vector.load %arg11[%c0_32, %c0_33] : memref<128x512xf32, #tpu.memory_space<vmem>>, vector<128x512xf32>
    %cst_34 = arith.constant dense<0.000000e+00> : vector<8x512xf32>
    %72 = tpu.matmul %68, %71, %cst_34 {dimension_numbers = #tpu.dot_dimension_numbers<[1], [0], [0], [1], [0, 0, 1, 1], [], []>} : vector<8x128xf32>, vector<128x512xf32>, vector<8x512xf32> -> vector<8x512xf32>
    %73 = arith.addf %70, %72 : vector<8x512xf32>
    %c0_35 = arith.constant 0 : index
    %c0_36 = arith.constant 0 : index
    %74 = vector.load %arg12[%c0_35, %c0_36] : memref<128x512xf32, #tpu.memory_space<vmem>>, vector<128x512xf32>
    %cst_37 = arith.constant dense<0.000000e+00> : vector<8x512xf32>
    %75 = tpu.matmul %32, %74, %cst_37 {dimension_numbers = #tpu.dot_dimension_numbers<[1], [0], [0], [1], [0, 0, 1, 1], [], []>} : vector<8x128xf32>, vector<128x512xf32>, vector<8x512xf32> -> vector<8x512xf32>
    %c0_38 = arith.constant 0 : index
    %c0_39 = arith.constant 0 : index
    %76 = vector.load %arg13[%c0_38, %c0_39] : memref<128x512xf32, #tpu.memory_space<vmem>>, vector<128x512xf32>
    %cst_40 = arith.constant dense<0.000000e+00> : vector<8x512xf32>
    %77 = tpu.matmul %68, %76, %cst_40 {dimension_numbers = #tpu.dot_dimension_numbers<[1], [0], [0], [1], [0, 0, 1, 1], [], []>} : vector<8x128xf32>, vector<128x512xf32>, vector<8x512xf32> -> vector<8x512xf32>
    %78 = arith.addf %75, %77 : vector<8x512xf32>
    %79 = arith.mulf %73, %78 : vector<8x512xf32>
    %c0_41 = arith.constant 0 : index
    %c0_42 = arith.constant 0 : index
    %80 = vector.load %arg14[%c0_41, %c0_42] : memref<512x16xf32, #tpu.memory_space<vmem>>, vector<512x16xf32>
    %cst_43 = arith.constant dense<0.000000e+00> : vector<8x16xf32>
    %81 = tpu.matmul %79, %80, %cst_43 {dimension_numbers = #tpu.dot_dimension_numbers<[1], [0], [0], [1], [0, 0, 1, 1], [], []>} : vector<8x512xf32>, vector<512x16xf32>, vector<8x16xf32> -> vector<8x16xf32>
    %82 = math.tanh %81 : vector<8x16xf32>
    %c0_44 = arith.constant 0 : index
    %c0_45 = arith.constant 0 : index
    %83 = vector.load %arg15[%c0_44, %c0_45] : memref<16x8xf32, #tpu.memory_space<vmem>>, vector<16x8xf32>
    %cst_46 = arith.constant dense<0.000000e+00> : vector<8x8xf32>
    %84 = tpu.matmul %82, %83, %cst_46 {dimension_numbers = #tpu.dot_dimension_numbers<[1], [0], [0], [1], [0, 0, 1, 1], [], []>} : vector<8x16xf32>, vector<16x8xf32>, vector<8x8xf32> -> vector<8x8xf32>
    %85 = vector.broadcast %3 : f32 to vector<8x8xf32>
    %86 = arith.addf %84, %85 : vector<8x8xf32>
    %c0_47 = arith.constant 0 : index
    %c0_48 = arith.constant 0 : index
    %87 = vector.load %arg17[%c0_47, %c0_48] : memref<8x8xf32, #tpu.memory_space<vmem>>, vector<8x8xf32>
    tpu.vector_store %arg17[%c0_47, %c0_48], %86 {strides = array<i32>} : memref<8x8xf32, #tpu.memory_space<vmem>>, vector<8x8xf32>,
    return
  }
  func.func @transform_0(%arg0: i32) -> (i32, i32) {
    %c0_i32 = arith.constant 0 : i32
    %c0_i32_0 = arith.constant 0 : i32
    return %arg0, %c0_i32 : i32, i32
  }
  func.func @transform_1(%arg0: i32) -> (i32, i32) {
    %c0_i32 = arith.constant 0 : i32
    %c0_i32_0 = arith.constant 0 : i32
    %c0_i32_1 = arith.constant 0 : i32
    return %c0_i32, %c0_i32_0 : i32, i32
  }
  func.func @transform_2(%arg0: i32) -> (i32, i32) {
    %c0_i32 = arith.constant 0 : i32
    %c0_i32_0 = arith.constant 0 : i32
    %c0_i32_1 = arith.constant 0 : i32
    return %c0_i32, %c0_i32_0 : i32, i32
  }
  func.func @transform_3(%arg0: i32) -> (i32, i32) {
    %c0_i32 = arith.constant 0 : i32
    %c0_i32_0 = arith.constant 0 : i32
    %c0_i32_1 = arith.constant 0 : i32
    return %c0_i32, %c0_i32_0 : i32, i32
  }
  func.func @transform_4(%arg0: i32) -> (i32, i32) {
    %c0_i32 = arith.constant 0 : i32
    %c0_i32_0 = arith.constant 0 : i32
    %c0_i32_1 = arith.constant 0 : i32
    return %c0_i32, %c0_i32_0 : i32, i32
  }
  func.func @transform_5(%arg0: i32) -> (i32, i32) {
    %c0_i32 = arith.constant 0 : i32
    %c0_i32_0 = arith.constant 0 : i32
    %c0_i32_1 = arith.constant 0 : i32
    return %c0_i32, %c0_i32_0 : i32, i32
  }
  func.func @transform_6(%arg0: i32) -> (i32, i32) {
    %c0_i32 = arith.constant 0 : i32
    %c0_i32_0 = arith.constant 0 : i32
    %c0_i32_1 = arith.constant 0 : i32
    return %c0_i32, %c0_i32_0 : i32, i32
  }
  func.func @transform_7(%arg0: i32) -> (i32, i32) {
    %c0_i32 = arith.constant 0 : i32
    %c0_i32_0 = arith.constant 0 : i32
    %c0_i32_1 = arith.constant 0 : i32
    return %c0_i32, %c0_i32_0 : i32, i32
  }
  func.func @transform_8(%arg0: i32) -> (i32, i32) {
    %c0_i32 = arith.constant 0 : i32
    %c0_i32_0 = arith.constant 0 : i32
    %c0_i32_1 = arith.constant 0 : i32
    return %c0_i32, %c0_i32_0 : i32, i32
  }
  func.func @transform_9(%arg0: i32) -> (i32, i32) {
    %c0_i32 = arith.constant 0 : i32
    %c0_i32_0 = arith.constant 0 : i32
    %c0_i32_1 = arith.constant 0 : i32
    return %c0_i32, %c0_i32_0 : i32, i32
  }
  func.func @transform_10(%arg0: i32) -> (i32, i32) {
    %c0_i32 = arith.constant 0 : i32
    %c0_i32_0 = arith.constant 0 : i32
    %c0_i32_1 = arith.constant 0 : i32
    return %c0_i32, %c0_i32_0 : i32, i32
  }
  func.func @transform_11(%arg0: i32) -> (i32, i32) {
    %c0_i32 = arith.constant 0 : i32
    %c0_i32_0 = arith.constant 0 : i32
    %c0_i32_1 = arith.constant 0 : i32
    return %c0_i32, %c0_i32_0 : i32, i32
  }
  func.func @transform_12(%arg0: i32) -> (i32, i32) {
    %c0_i32 = arith.constant 0 : i32
    %c0_i32_0 = arith.constant 0 : i32
    %c0_i32_1 = arith.constant 0 : i32
    return %c0_i32, %c0_i32_0 : i32, i32
  }
  func.func @transform_13(%arg0: i32) -> (i32, i32) {
    %c0_i32 = arith.constant 0 : i32
    %c0_i32_0 = arith.constant 0 : i32
    %c0_i32_1 = arith.constant 0 : i32
    return %c0_i32, %c0_i32_0 : i32, i32
  }
  func.func @transform_14(%arg0: i32) -> (i32, i32) {
    %c0_i32 = arith.constant 0 : i32
    %c0_i32_0 = arith.constant 0 : i32
    %c0_i32_1 = arith.constant 0 : i32
    return %c0_i32, %c0_i32_0 : i32, i32
  }
  func.func @transform_15(%arg0: i32) -> i32 {
    %c0_i32 = arith.constant 0 : i32
    %c0_i32_0 = arith.constant 0 : i32
    return %c0_i32 : i32
  }
  func.func @transform_16(%arg0: i32) -> (i32, i32) {
    %c0_i32 = arith.constant 0 : i32
    %c0_i32_0 = arith.constant 0 : i32
    return %arg0, %c0_i32 : i32, i32
  }
}

</mosaic_0001>

<llo_original>
// kernel: simple_link_deep_forward.1
$region0: #{simple_link_deep_forward.1}
  #allocation0 [shape = 'u32[]', space=smem, size = 0x4, offset = 0x4, fixed_abs, tag = 'smem constant byte address 0x4 - core index']
  #allocation1 [shape = 'u32[144,128]{1,0:T(1,128)}', space=vmem, size = 0x12000, scoped, tag = 'internal scratch']
  %s0 = inlined_call_operand.vmem [shape: bf16[8,128], index: 0, kind: input, shape index: {}]
  %s1 = inlined_call_operand.hbm [shape: bf16[128,128], index: 1, kind: input, shape index: {}]
  %s2 = inlined_call_operand.vmem [shape: f32[1,128], index: 2, kind: input, shape index: {}]
  %s3 = inlined_call_operand.hbm [shape: bf16[128,128], index: 3, kind: input, shape index: {}]
  %s4 = inlined_call_operand.vmem [shape: f32[1,128], index: 4, kind: input, shape index: {}]
  %s5 = inlined_call_operand.vmem [shape: bf16[128,512], index: 5, kind: input, shape index: {}]
  %s6 = inlined_call_operand.hbm [shape: f32[1,512], index: 6, kind: input, shape index: {}]
  %s7 = inlined_call_operand.hbm [shape: f32[128,128], index: 7, kind: input, shape index: {}]
  %s8 = inlined_call_operand.hbm [shape: f32[128,256], index: 8, kind: input, shape index: {}]
  %s9 = inlined_call_operand.vmem [shape: f32[128,512], index: 9, kind: input, shape index: {}]
  %s10 = inlined_call_operand.hbm [shape: f32[128,512], index: 10, kind: input, shape index: {}]
  %s11 = inlined_call_operand.hbm [shape: f32[128,512], index: 11, kind: input, shape index: {}]
  %s12 = inlined_call_operand.hbm [shape: f32[128,512], index: 12, kind: input, shape index: {}]
  %s13 = inlined_call_operand.vmem [shape: f32[512,16], index: 13, kind: input, shape index: {}]
  %s14 = inlined_call_operand.vmem [shape: f32[16,8], index: 14, kind: input, shape index: {}]
  %s15 = inlined_call_operand.hbm [shape: f32[4], index: 15, kind: input, shape index: {}]
  %s16 = inlined_call_operand.vmem [shape: f32[8,8], index: 16, kind: output, shape index: {}]
  %s17 = sld [smem:[#allocation0]]
  $region110: #{simple_link_deep_forward.1} parent=0
    _
  %s19 = ssub.s32 1, %s17
  %s20 = scalar_select 0, %s19, %s17
  $region1: #{simple_link_deep_forward.1} parent=0
    #allocation2 [shape = 'u8[32768]{0}', space=vmem, size = 0x8000, scoped, tag = 'input window, operand 1, single buffered']
    #allocation3 [shape = 's32[1]{0}', space=sflag, size = 0x4, scoped, tag = 'scoped memory for simple_link_deep_forward.1']
    #allocation4 [shape = 's32[1]{0}', space=sflag, size = 0x4, scoped, tag = 'scoped memory for simple_link_deep_forward.1']
    #allocation5 [shape = 'u8[32768]{0}', space=vmem, size = 0x8000, scoped, tag = 'input window, operand 3, single buffered']
    #allocation6 [shape = 's32[1]{0}', space=sflag, size = 0x4, scoped, tag = 'scoped memory for simple_link_deep_forward.1']
    #allocation7 [shape = 'u8[2048]{0}', space=vmem, size = 0x800, scoped, tag = 'input window, operand 6, single buffered']
    #allocation8 [shape = 'u8[65536]{0}', space=vmem, size = 0x10000, scoped, tag = 'input window, operand 7, single buffered']
    #allocation9 [shape = 's32[1]{0}', space=sflag, size = 0x4, scoped, tag = 'scoped memory for simple_link_deep_forward.1']
    #allocation10 [shape = 'u8[131072]{0}', space=vmem, size = 0x20000, scoped, tag = 'input window, operand 8, single buffered']
    #allocation11 [shape = 'u8[262144]{0}', space=vmem, size = 0x40000, scoped, tag = 'input window, operand 10, single buffered']
    #allocation12 [shape = 's32[1]{0}', space=sflag, size = 0x4, scoped, tag = 'scoped memory for simple_link_deep_forward.1']
    #allocation13 [shape = 'u8[262144]{0}', space=vmem, size = 0x40000, scoped, tag = 'input window, operand 11, single buffered']
    #allocation14 [shape = 'u8[262144]{0}', space=vmem, size = 0x40000, scoped, tag = 'input window, operand 12, single buffered']
    #allocation15 [shape = 's32[1]{0}', space=sflag, size = 0x4, scoped, tag = 'scoped memory for simple_link_deep_forward.1']
    #allocation16 [shape = 'u8[512]{0}', space=smem, size = 0x200, scoped, tag = 'input window, operand 15, single buffered']
    %21 = vsyncpa [#allocation3], 0
    %22 = vsyncpa [#allocation6], 0
    %23 = vsyncpa [#allocation9], 0
    %24 = vsyncpa [#allocation12], 0
    %25 = vsyncpa [#allocation15], 0
    %26 = vsyncpa [#allocation4], 0
    // Predicated region
    $region2: #{simple_link_deep_forward.1} parent=1 // pred_check
      _
    $region3: #{simple_link_deep_forward.1} parent=1 // pred_check_branch
      %28 = sbr.rel (0) target = $region5
    $region4: #{simple_link_deep_forward.1} parent=1 // pred_region
      _
    $region5: #{simple_link_deep_forward.1} parent=1 // pred_fallthru
      _
    // Predicated region
    $region6: #{simple_link_deep_forward.1} parent=1 // pred_check
      _
    $region7: #{simple_link_deep_forward.1} parent=1 // pred_check_branch
      %30 = sbr.rel (0) target = $region9
    $region8: #{simple_link_deep_forward.1} parent=1 // pred_region
      %s32 = ssub.s32 1024, 1024
      %33 = vsyncadd [#allocation3], %s32
      %s34 = sshll.u32 [#allocation2], 4
      %s35 = int_to_ptr.vmem [resolvable:$true] %s34
      %40 = dma.hbm_to_vmem [thread:$0]  %s1, 1024, %s35, [#allocation3], 64, 64, 4
    $region9: #{simple_link_deep_forward.1} parent=1 // pred_fallthru
      _
    // Predicated region
    $region10: #{simple_link_deep_forward.1} parent=1 // pred_check
      _
    $region11: #{simple_link_deep_forward.1} parent=1 // pred_check_branch
      %42 = sbr.rel (0) target = $region13
    $region12: #{simple_link_deep_forward.1} parent=1 // pred_region
      _
    $region13: #{simple_link_deep_forward.1} parent=1 // pred_fallthru
      _
    // Predicated region
    $region14: #{simple_link_deep_forward.1} parent=1 // pred_check
      _
    $region15: #{simple_link_deep_forward.1} parent=1 // pred_check_branch
      %44 = sbr.rel (0) target = $region17
    $region16: #{simple_link_deep_forward.1} parent=1 // pred_region
      %s46 = ssub.s32 1024, 1024
      %47 = vsyncadd [#allocation6], %s46
      %s48 = sshll.u32 [#allocation5], 4
      %s49 = int_to_ptr.vmem [resolvable:$true] %s48
      %54 = dma.hbm_to_vmem [thread:$0]  %s3, 1024, %s49, [#allocation6], 64, 64, 4
    $region17: #{simple_link_deep_forward.1} parent=1 // pred_fallthru
      _
    // Predicated region
    $region18: #{simple_link_deep_forward.1} parent=1 // pred_check
      _
    $region19: #{simple_link_deep_forward.1} parent=1 // pred_check_branch
      %56 = sbr.rel (0) target = $region21
    $region20: #{simple_link_deep_forward.1} parent=1 // pred_region
      _
    $region21: #{simple_link_deep_forward.1} parent=1 // pred_fallthru
      _
    // Predicated region
    $region22: #{simple_link_deep_forward.1} parent=1 // pred_check
      _
    $region23: #{simple_link_deep_forward.1} parent=1 // pred_check_branch
      %58 = sbr.rel (0) target = $region25
    $region24: #{simple_link_deep_forward.1} parent=1 // pred_region
      _
    $region25: #{simple_link_deep_forward.1} parent=1 // pred_fallthru
      _
    // Predicated region
    $region26: #{simple_link_deep_forward.1} parent=1 // pred_check
      _
    $region27: #{simple_link_deep_forward.1} parent=1 // pred_check_branch
      %60 = sbr.rel (0) target = $region29
    $region28: #{simple_link_deep_forward.1} parent=1 // pred_region
      %s62 = ssub.s32 64, 64
      %63 = vsyncadd [#allocation6], %s62
      %s65 = sshll.u32 [#allocation7], 4
      %s66 = int_to_ptr.vmem [resolvable:$true] %s65
      %68 = dma.hbm_to_vmem [thread:$0]  %s6, 64, %s66, [#allocation6]
    $region29: #{simple_link_deep_forward.1} parent=1 // pred_fallthru
      _
    // Predicated region
    $region30: #{simple_link_deep_forward.1} parent=1 // pred_check
      _
    $region31: #{simple_link_deep_forward.1} parent=1 // pred_check_branch
      %70 = sbr.rel (0) target = $region33
    $region32: #{simple_link_deep_forward.1} parent=1 // pred_region
      %s72 = ssub.s32 2048, 2048
      %73 = vsyncadd [#allocation9], %s72
      %s74 = sshll.u32 [#allocation8], 4
      %s75 = int_to_ptr.vmem [resolvable:$true] %s74
      %80 = dma.hbm_to_vmem [thread:$0]  %s7, 2048, %s75, [#allocation9], 128, 128, 8
    $region33: #{simple_link_deep_forward.1} parent=1 // pred_fallthru
      _
    // Predicated region
    $region34: #{simple_link_deep_forward.1} parent=1 // pred_check
      _
    $region35: #{simple_link_deep_forward.1} parent=1 // pred_check_branch
      %82 = sbr.rel (0) target = $region37
    $region36: #{simple_link_deep_forward.1} parent=1 // pred_region
      %s84 = ssub.s32 4096, 4096
      %85 = vsyncadd [#allocation9], %s84
      %s86 = sshll.u32 [#allocation10], 4
      %s87 = int_to_ptr.vmem [resolvable:$true] %s86
      %92 = dma.hbm_to_vmem [thread:$0]  %s8, 4096, %s87, [#allocation9], 256, 256, 16
    $region37: #{simple_link_deep_forward.1} parent=1 // pred_fallthru
      _
    // Predicated region
    $region38: #{simple_link_deep_forward.1} parent=1 // pred_check
      _
    $region39: #{simple_link_deep_forward.1} parent=1 // pred_check_branch
      %94 = sbr.rel (0) target = $region41
    $region40: #{simple_link_deep_forward.1} parent=1 // pred_region
      _
    $region41: #{simple_link_deep_forward.1} parent=1 // pred_fallthru
      _
    // Predicated region
    $region42: #{simple_link_deep_forward.1} parent=1 // pred_check
      _
    $region43: #{simple_link_deep_forward.1} parent=1 // pred_check_branch
      %96 = sbr.rel (0) target = $region45
    $region44: #{simple_link_deep_forward.1} parent=1 // pred_region
      %s98 = ssub.s32 8192, 8192
      %99 = vsyncadd [#allocation12], %s98
      %s100 = sshll.u32 [#allocation11], 4
      %s101 = int_to_ptr.vmem [resolvable:$true] %s100
      %106 = dma.hbm_to_vmem [thread:$0]  %s10, 8192, %s101, [#allocation12], 512, 512, 32
    $region45: #{simple_link_deep_forward.1} parent=1 // pred_fallthru
      _
    // Predicated region
    $region46: #{simple_link_deep_forward.1} parent=1 // pred_check
      _
    $region47: #{simple_link_deep_forward.1} parent=1 // pred_check_branch
      %108 = sbr.rel (0) target = $region49
    $region48: #{simple_link_deep_forward.1} parent=1 // pred_region
      %s110 = ssub.s32 8192, 8192
      %111 = vsyncadd [#allocation12], %s110
      %s112 = sshll.u32 [#allocation13], 4
      %s113 = int_to_ptr.vmem [resolvable:$true] %s112
      %118 = dma.hbm_to_vmem [thread:$0]  %s11, 8192, %s113, [#allocation12], 512, 512, 32
    $region49: #{simple_link_deep_forward.1} parent=1 // pred_fallthru
      _
    // Predicated region
    $region50: #{simple_link_deep_forward.1} parent=1 // pred_check
      _
    $region51: #{simple_link_deep_forward.1} parent=1 // pred_check_branch
      %120 = sbr.rel (0) target = $region53
    $region52: #{simple_link_deep_forward.1} parent=1 // pred_region
      %s122 = ssub.s32 8192, 8192
      %123 = vsyncadd [#allocation15], %s122
      %s124 = sshll.u32 [#allocation14], 4
      %s125 = int_to_ptr.vmem [resolvable:$true] %s124
      %130 = dma.hbm_to_vmem [thread:$0]  %s12, 8192, %s125, [#allocation15], 512, 512, 32
    $region53: #{simple_link_deep_forward.1} parent=1 // pred_fallthru
      _
    // Predicated region
    $region54: #{simple_link_deep_forward.1} parent=1 // pred_check
      _
    $region55: #{simple_link_deep_forward.1} parent=1 // pred_check_branch
      %132 = sbr.rel (0) target = $region57
    $region56: #{simple_link_deep_forward.1} parent=1 // pred_region
      _
    $region57: #{simple_link_deep_forward.1} parent=1 // pred_fallthru
      _
    // Predicated region
    $region58: #{simple_link_deep_forward.1} parent=1 // pred_check
      _
    $region59: #{simple_link_deep_forward.1} parent=1 // pred_check_branch
      %134 = sbr.rel (0) target = $region61
    $region60: #{simple_link_deep_forward.1} parent=1 // pred_region
      _
    $region61: #{simple_link_deep_forward.1} parent=1 // pred_fallthru
      _
    // Predicated region
    $region62: #{simple_link_deep_forward.1} parent=1 // pred_check
      _
    $region63: #{simple_link_deep_forward.1} parent=1 // pred_check_branch
      %136 = sbr.rel (0) target = $region65
    $region64: #{simple_link_deep_forward.1} parent=1 // pred_region
      %s138 = ssub.s32 16, 16
      %139 = vsyncadd [#allocation4], %s138
      %142 = dma.hbm_to_smem %s15, 16, [#allocation16], [#allocation4]
    $region65: #{simple_link_deep_forward.1} parent=1 // pred_fallthru
      _
    // Predicated region
    $region66: #{simple_link_deep_forward.1} parent=1 // pred_check
      _
    $region67: #{simple_link_deep_forward.1} parent=1 // pred_check_branch
      %144 = sbr.rel (0) target = $region69
    $region68: #{simple_link_deep_forward.1} parent=1 // pred_region
      %145 = dma.done [#allocation3], 1024
    $region69: #{simple_link_deep_forward.1} parent=1 // pred_fallthru
      _
    // Predicated region
    $region70: #{simple_link_deep_forward.1} parent=1 // pred_check
      _
    $region71: #{simple_link_deep_forward.1} parent=1 // pred_check_branch
      %147 = sbr.rel (0) target = $region73
    $region72: #{simple_link_deep_forward.1} parent=1 // pred_region
      %148 = dma.done [#allocation6], 1024
    $region73: #{simple_link_deep_forward.1} parent=1 // pred_fallthru
      _
    // Predicated region
    $region74: #{simple_link_deep_forward.1} parent=1 // pred_check
      _
    $region75: #{simple_link_deep_forward.1} parent=1 // pred_check_branch
      %150 = sbr.rel (0) target = $region77
    $region76: #{simple_link_deep_forward.1} parent=1 // pred_region
      %151 = dma.done [#allocation6], 64
    $region77: #{simple_link_deep_forward.1} parent=1 // pred_fallthru
      _
    // Predicated region
    $region78: #{simple_link_deep_forward.1} parent=1 // pred_check
      _
    $region79: #{simple_link_deep_forward.1} parent=1 // pred_check_branch
      %153 = sbr.rel (0) target = $region81
    $region80: #{simple_link_deep_forward.1} parent=1 // pred_region
      %154 = dma.done [#allocation9], 2048
    $region81: #{simple_link_deep_forward.1} parent=1 // pred_fallthru
      _
    // Predicated region
    $region82: #{simple_link_deep_forward.1} parent=1 // pred_check
      _
    $region83: #{simple_link_deep_forward.1} parent=1 // pred_check_branch
      %156 = sbr.rel (0) target = $region85
    $region84: #{simple_link_deep_forward.1} parent=1 // pred_region
      %157 = dma.done [#allocation9], 4096
    $region85: #{simple_link_deep_forward.1} parent=1 // pred_fallthru
      _
    // Predicated region
    $region86: #{simple_link_deep_forward.1} parent=1 // pred_check
      _
    $region87: #{simple_link_deep_forward.1} parent=1 // pred_check_branch
      %159 = sbr.rel (0) target = $region89
    $region88: #{simple_link_deep_forward.1} parent=1 // pred_region
      %160 = dma.done [#allocation12], 8192
    $region89: #{simple_link_deep_forward.1} parent=1 // pred_fallthru
      _
    // Predicated region
    $region90: #{simple_link_deep_forward.1} parent=1 // pred_check
      _
    $region91: #{simple_link_deep_forward.1} parent=1 // pred_check_branch
      %162 = sbr.rel (0) target = $region93
    $region92: #{simple_link_deep_forward.1} parent=1 // pred_region
      %163 = dma.done [#allocation12], 8192
    $region93: #{simple_link_deep_forward.1} parent=1 // pred_fallthru
      _
    // Predicated region
    $region94: #{simple_link_deep_forward.1} parent=1 // pred_check
      _
    $region95: #{simple_link_deep_forward.1} parent=1 // pred_check_branch
      %165 = sbr.rel (0) target = $region97
    $region96: #{simple_link_deep_forward.1} parent=1 // pred_region
      %166 = dma.done [#allocation15], 8192
    $region97: #{simple_link_deep_forward.1} parent=1 // pred_fallthru
      _
    // Predicated region
    $region98: #{simple_link_deep_forward.1} parent=1 // pred_check
      _
    $region99: #{simple_link_deep_forward.1} parent=1 // pred_check_branch
      %168 = sbr.rel (0) target = $region101
    $region100: #{simple_link_deep_forward.1} parent=1 // pred_region
      %169 = dma.done [#allocation4], 16
    $region101: #{simple_link_deep_forward.1} parent=1 // pred_fallthru
      _
    %170 = sfence
    %s172 = sld [smem:[#allocation16]]
    %s173 = sld [smem:[#allocation16 + $0x1]]
    %s174 = sld [smem:[#allocation16 + $0x2]]
    %s175 = sld [smem:[#allocation16 + $0x3]]
    %v176 = vld [vmem:[%s0] sm:$0xf]
    %v177 = vld [vmem:[#allocation2] sm:$0xf]
    %v178 = vld [vmem:[#allocation2 + $0x4] sm:$0xf]
    %v179 = vld [vmem:[#allocation2 + $0x8] sm:$0xf]
    %v180 = vld [vmem:[#allocation2 + $0xc] sm:$0xf]
    %v181 = vld [vmem:[#allocation2 + $0x10] sm:$0xf]
    %v182 = vld [vmem:[#allocation2 + $0x14] sm:$0xf]
    %v183 = vld [vmem:[#allocation2 + $0x18] sm:$0xf]
    %v184 = vld [vmem:[#allocation2 + $0x1c] sm:$0xf]
    %v185 = vld [vmem:[#allocation2 + $0x20] sm:$0xf]
    %v186 = vld [vmem:[#allocation2 + $0x24] sm:$0xf]
    %v187 = vld [vmem:[#allocation2 + $0x28] sm:$0xf]
    %v188 = vld [vmem:[#allocation2 + $0x2c] sm:$0xf]
    %v189 = vld [vmem:[#allocation2 + $0x30] sm:$0xf]
    %v190 = vld [vmem:[#allocation2 + $0x34] sm:$0xf]
    %v191 = vld [vmem:[#allocation2 + $0x38] sm:$0xf]
    %v192 = vld [vmem:[#allocation2 + $0x3c] sm:$0xf]
    %v193 = vld [vmem:[%s2] sm:$0x1]
    %v195 = vlaneseq
    %v196 = vshrl.u32 %v195, 7
    %v197 = vsub.s32 0, %v196
    %v198 = vrot.slane %v193, %v197
    %v216 = vunpack.c.l.b16 %v177
    %v217 = vunpack.c.l.b16 %v178
    %v218 = vunpack.c.l.b16 %v179
    %v219 = vunpack.c.l.b16 %v180
    %v220 = vunpack.c.l.b16 %v181
    %v221 = vunpack.c.l.b16 %v182
    %v222 = vunpack.c.l.b16 %v183
    %v223 = vunpack.c.l.b16 %v184
    %v224 = vunpack.c.l.b16 %v185
    %v225 = vunpack.c.l.b16 %v186
    %v226 = vunpack.c.l.b16 %v187
    %v227 = vunpack.c.l.b16 %v188
    %v228 = vunpack.c.l.b16 %v189
    %v229 = vunpack.c.l.b16 %v190
    %v230 = vunpack.c.l.b16 %v191
    %v231 = vunpack.c.l.b16 %v192
    %v232 = vpack.c.b16 %v217, %v216
    %v233 = vpack.c.b16 %v219, %v218
    %v234 = vpack.c.b16 %v221, %v220
    %v235 = vpack.c.b16 %v223, %v222
    %v236 = vpack.c.b16 %v225, %v224
    %v237 = vpack.c.b16 %v227, %v226
    %v238 = vpack.c.b16 %v229, %v228
    %v239 = vpack.c.b16 %v231, %v230
    %248 = vmatprep.subr.bf16.mxu0 0
    %249 = vmatpush1.bf16.msra.mxu0 %v232
    %250 = vmatprep.subr.bf16.mxu0 0
    %251 = vmatpush1.bf16.msra.mxu0 %v233
    %252 = vmatprep.subr.bf16.mxu0 0
    %253 = vmatpush1.bf16.msra.mxu0 %v234
    %254 = vmatprep.subr.bf16.mxu0 0
    %255 = vmatpush1.bf16.msra.mxu0 %v235
    %256 = vmatprep.subr.bf16.mxu0 0
    %257 = vmatpush1.bf16.msra.mxu0 %v236
    %258 = vmatprep.subr.bf16.mxu0 0
    %259 = vmatpush1.bf16.msra.mxu0 %v237
    %260 = vmatprep.subr.bf16.mxu0 0
    %261 = vmatpush1.bf16.msra.mxu0 %v238
    %262 = vmatprep.subr.bf16.mxu0 0
    %263 = vmatpush1.bf16.msra.mxu0 %v239
    %264 = vmatprep.subr.bf16.mxu0 0
    %265 = vmatpush1.bf16.msra.mxu0 0
    %266 = vmatprep.subr.bf16.mxu0 0
    %267 = vmatpush1.bf16.msra.mxu0 0
    %268 = vmatprep.subr.bf16.mxu0 0
    %269 = vmatpush1.bf16.msra.mxu0 0
    %270 = vmatprep.subr.bf16.mxu0 0
    %271 = vmatpush1.bf16.msra.mxu0 0
    %272 = vmatprep.subr.bf16.mxu0 0
    %273 = vmatpush1.bf16.msra.mxu0 0
    %274 = vmatprep.subr.bf16.mxu0 0
    %275 = vmatpush1.bf16.msra.mxu0 0
    %276 = vmatprep.subr.bf16.mxu0 0
    %277 = vmatpush1.bf16.msra.mxu0 0
    %278 = vmatprep.subr.bf16.mxu0 0
    %279 = vmatpush1.bf16.msra.mxu0 0
    %280 = vmatprep.mubr.bf16.mxu0 0
    %281 = vmatmul.mubr.bf16.gmra.mrb[0].mxu0 %v176
    %v282 = vpop.f32.mrb[0].mxu0
    %v283 = vadd.f32 %v198, %v282
    %v284 = vpop.f32.mrb[0].mxu0
    %v285 = vpop.f32.mrb[0].mxu0
    %v286 = vpop.f32.mrb[0].mxu0
    %287 = vdwg.mxu0
    %vm288 = vcmp.ge.f32.partialorder %v283, 0.0
    %v289 = vstv %s172
    %v290 = vmul.f32 %v289, %v283
    %v291 = vsel %vm288, %v283, %v290
    %v292 = vpack.c.bf16 %v291, %v291
    %v293 = vld [vmem:[#allocation5] sm:$0xf]
    %v294 = vld [vmem:[#allocation5 + $0x4] sm:$0xf]
    %v295 = vld [vmem:[#allocation5 + $0x8] sm:$0xf]
    %v296 = vld [vmem:[#allocation5 + $0xc] sm:$0xf]
    %v297 = vld [vmem:[#allocation5 + $0x10] sm:$0xf]
    %v298 = vld [vmem:[#allocation5 + $0x14] sm:$0xf]
    %v299 = vld [vmem:[#allocation5 + $0x18] sm:$0xf]
    %v300 = vld [vmem:[#allocation5 + $0x1c] sm:$0xf]
    %v301 = vld [vmem:[#allocation5 + $0x20] sm:$0xf]
    %v302 = vld [vmem:[#allocation5 + $0x24] sm:$0xf]
    %v303 = vld [vmem:[#allocation5 + $0x28] sm:$0xf]
    %v304 = vld [vmem:[#allocation5 + $0x2c] sm:$0xf]
    %v305 = vld [vmem:[#allocation5 + $0x30] sm:$0xf]
    %v306 = vld [vmem:[#allocation5 + $0x34] sm:$0xf]
    %v307 = vld [vmem:[#allocation5 + $0x38] sm:$0xf]
    %v308 = vld [vmem:[#allocation5 + $0x3c] sm:$0xf]
    %v309 = vld [vmem:[%s4] sm:$0x1]
    %v311 = vlaneseq
    %v312 = vshrl.u32 %v311, 7
    %v313 = vsub.s32 0, %v312
    %v314 = vrot.slane %v309, %v313
    %v332 = vunpack.c.l.b16 %v293
    %v333 = vunpack.c.l.b16 %v294
    %v334 = vunpack.c.l.b16 %v295
    %v335 = vunpack.c.l.b16 %v296
    %v336 = vunpack.c.l.b16 %v297
    %v337 = vunpack.c.l.b16 %v298
    %v338 = vunpack.c.l.b16 %v299
    %v339 = vunpack.c.l.b16 %v300
    %v340 = vunpack.c.l.b16 %v301
    %v341 = vunpack.c.l.b16 %v302
    %v342 = vunpack.c.l.b16 %v303
    %v343 = vunpack.c.l.b16 %v304
    %v344 = vunpack.c.l.b16 %v305
    %v345 = vunpack.c.l.b16 %v306
    %v346 = vunpack.c.l.b16 %v307
    %v347 = vunpack.c.l.b16 %v308
    %v348 = vpack.c.b16 %v333, %v332
    %v349 = vpack.c.b16 %v335, %v334
    %v350 = vpack.c.b16 %v337, %v336
    %v351 = vpack.c.b16 %v339, %v338
    %v352 = vpack.c.b16 %v341, %v340
    %v353 = vpack.c.b16 %v343, %v342
    %v354 = vpack.c.b16 %v345, %v344
    %v355 = vpack.c.b16 %v347, %v346
    %364 = vmatprep.subr.bf16.mxu0 0
    %365 = vmatpush1.bf16.msra.mxu0 %v348
    %366 = vmatprep.subr.bf16.mxu0 0
    %367 = vmatpush1.bf16.msra.mxu0 %v349
    %368 = vmatprep.subr.bf16.mxu0 0
    %369 = vmatpush1.bf16.msra.mxu0 %v350
    %370 = vmatprep.subr.bf16.mxu0 0
    %371 = vmatpush1.bf16.msra.mxu0 %v351
    %372 = vmatprep.subr.bf16.mxu0 0
    %373 = vmatpush1.bf16.msra.mxu0 %v352
    %374 = vmatprep.subr.bf16.mxu0 0
    %375 = vmatpush1.bf16.msra.mxu0 %v353
    %376 = vmatprep.subr.bf16.mxu0 0
    %377 = vmatpush1.bf16.msra.mxu0 %v354
    %378 = vmatprep.subr.bf16.mxu0 0
    %379 = vmatpush1.bf16.msra.mxu0 %v355
    %380 = vmatprep.subr.bf16.mxu0 0
    %381 = vmatpush1.bf16.msra.mxu0 0
    %382 = vmatprep.subr.bf16.mxu0 0
    %383 = vmatpush1.bf16.msra.mxu0 0
    %384 = vmatprep.subr.bf16.mxu0 0
    %385 = vmatpush1.bf16.msra.mxu0 0
    %386 = vmatprep.subr.bf16.mxu0 0
    %387 = vmatpush1.bf16.msra.mxu0 0
    %388 = vmatprep.subr.bf16.mxu0 0
    %389 = vmatpush1.bf16.msra.mxu0 0
    %390 = vmatprep.subr.bf16.mxu0 0
    %391 = vmatpush1.bf16.msra.mxu0 0
    %392 = vmatprep.subr.bf16.mxu0 0
    %393 = vmatpush1.bf16.msra.mxu0 0
    %394 = vmatprep.subr.bf16.mxu0 0
    %395 = vmatpush1.bf16.msra.mxu0 0
    %396 = vmatprep.mubr.bf16.mxu0 0
    %397 = vmatmul.mubr.bf16.gmra.mrb[0].mxu0 %v292
    %v398 = vpop.f32.mrb[0].mxu0
    %v399 = vadd.f32 %v314, %v398
    %v400 = vpop.f32.mrb[0].mxu0
    %v401 = vpop.f32.mrb[0].mxu0
    %v402 = vpop.f32.mrb[0].mxu0
    %403 = vdwg.mxu0
    %v404 = vmul.f32 %v399, %v399
    %v405 = vld [vmem:[#allocation8] sm:$0xff]
    %v406 = vld [vmem:[#allocation8 + $0x8] sm:$0xff]
    %v407 = vld [vmem:[#allocation8 + $0x10] sm:$0xff]
    %v408 = vld [vmem:[#allocation8 + $0x18] sm:$0xff]
    %v409 = vld [vmem:[#allocation8 + $0x20] sm:$0xff]
    %v410 = vld [vmem:[#allocation8 + $0x28] sm:$0xff]
    %v411 = vld [vmem:[#allocation8 + $0x30] sm:$0xff]
    %v412 = vld [vmem:[#allocation8 + $0x38] sm:$0xff]
    %v413 = vld [vmem:[#allocation8 + $0x40] sm:$0xff]
    %v414 = vld [vmem:[#allocation8 + $0x48] sm:$0xff]
    %v415 = vld [vmem:[#allocation8 + $0x50] sm:$0xff]
    %v416 = vld [vmem:[#allocation8 + $0x58] sm:$0xff]
    %v417 = vld [vmem:[#allocation8 + $0x60] sm:$0xff]
    %v418 = vld [vmem:[#allocation8 + $0x68] sm:$0xff]
    %v419 = vld [vmem:[#allocation8 + $0x70] sm:$0xff]
    %v420 = vld [vmem:[#allocation8 + $0x78] sm:$0xff]
    %421 = vmatprep.subr.mxu0 0.0
    %422 = vmatpush1.msra.mxu0 %v405
    %423 = vmatprep.subr.mxu0 0.0
    %424 = vmatpush1.msra.mxu0 %v406
    %425 = vmatprep.subr.mxu0 0.0
    %426 = vmatpush1.msra.mxu0 %v407
    %427 = vmatprep.subr.mxu0 0.0
    %428 = vmatpush1.msra.mxu0 %v408
    %429 = vmatprep.subr.mxu0 0.0
    %430 = vmatpush1.msra.mxu0 %v409
    %431 = vmatprep.subr.mxu0 0.0
    %432 = vmatpush1.msra.mxu0 %v410
    %433 = vmatprep.subr.mxu0 0.0
    %434 = vmatpush1.msra.mxu0 %v411
    %435 = vmatprep.subr.mxu0 0.0
    %436 = vmatpush1.msra.mxu0 %v412
    %437 = vmatprep.subr.mxu0 0.0
    %438 = vmatpush1.msra.mxu0 %v413
    %439 = vmatprep.subr.mxu0 0.0
    %440 = vmatpush1.msra.mxu0 %v414
    %441 = vmatprep.subr.mxu0 0.0
    %442 = vmatpush1.msra.mxu0 %v415
    %443 = vmatprep.subr.mxu0 0.0
    %444 = vmatpush1.msra.mxu0 %v416
    %445 = vmatprep.subr.mxu0 0.0
    %446 = vmatpush1.msra.mxu0 %v417
    %447 = vmatprep.subr.mxu0 0.0
    %448 = vmatpush1.msra.mxu0 %v418
    %449 = vmatprep.subr.mxu0 0.0
    %450 = vmatpush1.msra.mxu0 %v419
    %451 = vmatprep.subr.mxu0 0.0
    %452 = vmatpush1.msra.mxu0 %v420
    %453 = vmatprep.subr.mxu0 0.0
    %454 = vmatpush1.msra.mxu0 0.0
    %455 = vmatprep.subr.mxu0 0.0
    %456 = vmatpush1.msra.mxu0 0.0
    %457 = vmatprep.subr.mxu0 0.0
    %458 = vmatpush1.msra.mxu0 0.0
    %459 = vmatprep.subr.mxu0 0.0
    %460 = vmatpush1.msra.mxu0 0.0
    %461 = vmatprep.subr.mxu0 0.0
    %462 = vmatpush1.msra.mxu0 0.0
    %463 = vmatprep.subr.mxu0 0.0
    %464 = vmatpush1.msra.mxu0 0.0
    %465 = vmatprep.subr.mxu0 0.0
    %466 = vmatpush1.msra.mxu0 0.0
    %467 = vmatprep.subr.mxu0 0.0
    %468 = vmatpush1.msra.mxu0 0.0
    %469 = vmatprep.subr.mxu0 0.0
    %470 = vmatpush1.msra.mxu0 0.0
    %471 = vmatprep.subr.mxu0 0.0
    %472 = vmatpush1.msra.mxu0 0.0
    %473 = vmatprep.subr.mxu0 0.0
    %474 = vmatpush1.msra.mxu0 0.0
    %475 = vmatprep.subr.mxu0 0.0
    %476 = vmatpush1.msra.mxu0 0.0
    %477 = vmatprep.subr.mxu0 0.0
    %478 = vmatpush1.msra.mxu0 0.0
    %479 = vmatprep.subr.mxu0 0.0
    %480 = vmatpush1.msra.mxu0 0.0
    %481 = vmatprep.subr.mxu0 0.0
    %482 = vmatpush1.msra.mxu0 0.0
    %483 = vmatprep.subr.mxu0 0.0
    %484 = vmatpush1.msra.mxu0 0.0
    %485 = vmatprep.mubr.f32.mxu0 0.0
    %486 = vmatmul.mubr.f32.gmra.mrb[0].mxu0 %v404
    %v487 = vpop.f32.mrb[0].mxu0
    %v488 = vadd.f32 0.0, %v487
    %v489 = vpop.f32.mrb[0].mxu0
    %490 = vdwg.mxu0
    %v491 = vmax.f32 %v488, 1e-24
    %v492 = vrsqrt.pop %v491
    %v493 = vmul.f32 %v399, %v492
    %vm494 = vcmp.ge.f32.partialorder %v493, 0.0
    %v495 = vstv %s173
    %v496 = vmul.f32 %v495, %v493
    %v497 = vsel %vm494, %v493, %v496
    %v498 = vpack.c.bf16 %v497, %v497
    %v499 = vld [vmem:[%s5] sm:$0xff]
    %v500 = vld [vmem:[%s5 + $0x8] sm:$0xff]
    %v501 = vld [vmem:[%s5 + $0x10] sm:$0xff]
    %v502 = vld [vmem:[%s5 + $0x18] sm:$0xff]
    %v503 = vld [vmem:[%s5 + $0x20] sm:$0xff]
    %v504 = vld [vmem:[%s5 + $0x28] sm:$0xff]
    %v505 = vld [vmem:[%s5 + $0x30] sm:$0xff]
    %v506 = vld [vmem:[%s5 + $0x38] sm:$0xff]
    %v507 = vld [vmem:[%s5 + $0x40] sm:$0xff]
    %v508 = vld [vmem:[%s5 + $0x48] sm:$0xff]
    %v509 = vld [vmem:[%s5 + $0x50] sm:$0xff]
    %v510 = vld [vmem:[%s5 + $0x58] sm:$0xff]
    %v511 = vld [vmem:[%s5 + $0x60] sm:$0xff]
    %v512 = vld [vmem:[%s5 + $0x68] sm:$0xff]
    %v513 = vld [vmem:[%s5 + $0x70] sm:$0xff]
    %v514 = vld [vmem:[%s5 + $0x78] sm:$0xff]
    %v515 = vld [vmem:[%s5 + $0x80] sm:$0xff]
    %v516 = vld [vmem:[%s5 + $0x88] sm:$0xff]
    %v517 = vld [vmem:[%s5 + $0x90] sm:$0xff]
    %v518 = vld [vmem:[%s5 + $0x98] sm:$0xff]
    %v519 = vld [vmem:[%s5 + $0xa0] sm:$0xff]
    %v520 = vld [vmem:[%s5 + $0xa8] sm:$0xff]
    %v521 = vld [vmem:[%s5 + $0xb0] sm:$0xff]
    %v522 = vld [vmem:[%s5 + $0xb8] sm:$0xff]
    %v523 = vld [vmem:[%s5 + $0xc0] sm:$0xff]
    %v524 = vld [vmem:[%s5 + $0xc8] sm:$0xff]
    %v525 = vld [vmem:[%s5 + $0xd0] sm:$0xff]
    %v526 = vld [vmem:[%s5 + $0xd8] sm:$0xff]
    %v527 = vld [vmem:[%s5 + $0xe0] sm:$0xff]
    %v528 = vld [vmem:[%s5 + $0xe8] sm:$0xff]
    %v529 = vld [vmem:[%s5 + $0xf0] sm:$0xff]
    %v530 = vld [vmem:[%s5 + $0xf8] sm:$0xff]
    %v531 = vld [vmem:[#allocation7] sm:$0xf]
    %v533 = vlaneseq
    %v534 = vshrl.u32 %v533, 7
    %v535 = vsub.s32 0, %v534
    %v536 = vrot.slane %v531, %v535
    %v537 = vlaneseq
    %v538 = vshrl.u32 %v537, 7
    %v539 = vsub.s32 1, %v538
    %v540 = vrot.slane %v531, %v539
    %v541 = vlaneseq
    %v542 = vshrl.u32 %v541, 7
    %v543 = vsub.s32 2, %v542
    %v544 = vrot.slane %v531, %v543
    %v545 = vlaneseq
    %v546 = vshrl.u32 %v545, 7
    %v547 = vsub.s32 3, %v546
    %v548 = vrot.slane %v531, %v547
    %v585 = vunpack.c.l.b16 %v499
    %v586 = vunpack.c.h.b16 %v499
    %v587 = vunpack.c.l.b16 %v500
    %v588 = vunpack.c.h.b16 %v500
    %v589 = vunpack.c.l.b16 %v501
    %v590 = vunpack.c.h.b16 %v501
    %v591 = vunpack.c.l.b16 %v502
    %v592 = vunpack.c.h.b16 %v502
    %v593 = vunpack.c.l.b16 %v503
    %v594 = vunpack.c.h.b16 %v503
    %v595 = vunpack.c.l.b16 %v504
    %v596 = vunpack.c.h.b16 %v504
    %v597 = vunpack.c.l.b16 %v505
    %v598 = vunpack.c.h.b16 %v505
    %v599 = vunpack.c.l.b16 %v506
    %v600 = vunpack.c.h.b16 %v506
    %v601 = vunpack.c.l.b16 %v507
    %v602 = vunpack.c.h.b16 %v507
    %v603 = vunpack.c.l.b16 %v508
    %v604 = vunpack.c.h.b16 %v508
    %v605 = vunpack.c.l.b16 %v509
    %v606 = vunpack.c.h.b16 %v509
    %v607 = vunpack.c.l.b16 %v510
    %v608 = vunpack.c.h.b16 %v510
    %v609 = vunpack.c.l.b16 %v511
    %v610 = vunpack.c.h.b16 %v511
    %v611 = vunpack.c.l.b16 %v512
    %v612 = vunpack.c.h.b16 %v512
    %v613 = vunpack.c.l.b16 %v513
    %v614 = vunpack.c.h.b16 %v513
    %v615 = vunpack.c.l.b16 %v514
    %v616 = vunpack.c.h.b16 %v514
    %v617 = vunpack.c.l.b16 %v515
    %v618 = vunpack.c.h.b16 %v515
    %v619 = vunpack.c.l.b16 %v516
    %v620 = vunpack.c.h.b16 %v516
    %v621 = vunpack.c.l.b16 %v517
    %v622 = vunpack.c.h.b16 %v517
    %v623 = vunpack.c.l.b16 %v518
    %v624 = vunpack.c.h.b16 %v518
    %v625 = vunpack.c.l.b16 %v519
    %v626 = vunpack.c.h.b16 %v519
    %v627 = vunpack.c.l.b16 %v520
    %v628 = vunpack.c.h.b16 %v520
    %v629 = vunpack.c.l.b16 %v521
    %v630 = vunpack.c.h.b16 %v521
    %v631 = vunpack.c.l.b16 %v522
    %v632 = vunpack.c.h.b16 %v522
    %v633 = vunpack.c.l.b16 %v523
    %v634 = vunpack.c.h.b16 %v523
    %v635 = vunpack.c.l.b16 %v524
    %v636 = vunpack.c.h.b16 %v524
    %v637 = vunpack.c.l.b16 %v525
    %v638 = vunpack.c.h.b16 %v525
    %v639 = vunpack.c.l.b16 %v526
    %v640 = vunpack.c.h.b16 %v526
    %v641 = vunpack.c.l.b16 %v527
    %v642 = vunpack.c.h.b16 %v527
    %v643 = vunpack.c.l.b16 %v528
    %v644 = vunpack.c.h.b16 %v528
    %v645 = vunpack.c.l.b16 %v529
    %v646 = vunpack.c.h.b16 %v529
    %v647 = vunpack.c.l.b16 %v530
    %v648 = vunpack.c.h.b16 %v530
    %v649 = vpack.c.b16 %v589, %v585
    %v650 = vpack.c.b16 %v590, %v586
    %v651 = vpack.c.b16 %v591, %v587
    %v652 = vpack.c.b16 %v592, %v588
    %v653 = vpack.c.b16 %v597, %v593
    %v654 = vpack.c.b16 %v598, %v594
    %v655 = vpack.c.b16 %v599, %v595
    %v656 = vpack.c.b16 %v600, %v596
    %v657 = vpack.c.b16 %v605, %v601
    %v658 = vpack.c.b16 %v606, %v602
    %v659 = vpack.c.b16 %v607, %v603
    %v660 = vpack.c.b16 %v608, %v604
    %v661 = vpack.c.b16 %v613, %v609
    %v662 = vpack.c.b16 %v614, %v610
    %v663 = vpack.c.b16 %v615, %v611
    %v664 = vpack.c.b16 %v616, %v612
    %v665 = vpack.c.b16 %v621, %v617
    %v666 = vpack.c.b16 %v622, %v618
    %v667 = vpack.c.b16 %v623, %v619
    %v668 = vpack.c.b16 %v624, %v620
    %v669 = vpack.c.b16 %v629, %v625
    %v670 = vpack.c.b16 %v630, %v626
    %v671 = vpack.c.b16 %v631, %v627
    %v672 = vpack.c.b16 %v632, %v628
    %v673 = vpack.c.b16 %v637, %v633
    %v674 = vpack.c.b16 %v638, %v634
    %v675 = vpack.c.b16 %v639, %v635
    %v676 = vpack.c.b16 %v640, %v636
    %v677 = vpack.c.b16 %v645, %v641
    %v678 = vpack.c.b16 %v646, %v642
    %v679 = vpack.c.b16 %v647, %v643
    %v680 = vpack.c.b16 %v648, %v644
    %713 = vmatprep.subr.bf16.mxu0 %v650
    %714 = vmatpush1.bf16.msra.mxu0 %v649
    %715 = vmatprep.subr.bf16.mxu0 %v654
    %716 = vmatpush1.bf16.msra.mxu0 %v653
    %717 = vmatprep.subr.bf16.mxu0 %v658
    %718 = vmatpush1.bf16.msra.mxu0 %v657
    %719 = vmatprep.subr.bf16.mxu0 %v662
    %720 = vmatpush1.bf16.msra.mxu0 %v661
    %721 = vmatprep.subr.bf16.mxu0 %v666
    %722 = vmatpush1.bf16.msra.mxu0 %v665
    %723 = vmatprep.subr.bf16.mxu0 %v670
    %724 = vmatpush1.bf16.msra.mxu0 %v669
    %725 = vmatprep.subr.bf16.mxu0 %v674
    %726 = vmatpush1.bf16.msra.mxu0 %v673
    %727 = vmatprep.subr.bf16.mxu0 %v678
    %728 = vmatpush1.bf16.msra.mxu0 %v677
    %729 = vmatprep.subr.bf16.mxu0 0
    %730 = vmatpush1.bf16.msra.mxu0 0
    %731 = vmatprep.subr.bf16.mxu0 0
    %732 = vmatpush1.bf16.msra.mxu0 0
    %733 = vmatprep.subr.bf16.mxu0 0
    %734 = vmatpush1.bf16.msra.mxu0 0
    %735 = vmatprep.subr.bf16.mxu0 0
    %736 = vmatpush1.bf16.msra.mxu0 0
    %737 = vmatprep.subr.bf16.mxu0 0
    %738 = vmatpush1.bf16.msra.mxu0 0
    %739 = vmatprep.subr.bf16.mxu0 0
    %740 = vmatpush1.bf16.msra.mxu0 0
    %741 = vmatprep.subr.bf16.mxu0 0
    %742 = vmatpush1.bf16.msra.mxu0 0
    %743 = vmatprep.subr.bf16.mxu0 0
    %744 = vmatpush1.bf16.msra.mxu0 0
    %745 = vmatprep.mubr.bf16.mxu0 0
    %746 = vmatmul.mubr.bf16.gmra.mrb[0].mxu0 %v498
    %v747 = vpop.f32.mrb[0].mxu0
    %v748 = vadd.f32 %v536, %v747
    %v749 = vpop.f32.mrb[0].mxu0
    %v750 = vadd.f32 %v540, %v749
    %v751 = vpop.f32.mrb[0].mxu0
    %v752 = vpop.f32.mrb[0].mxu0
    %753 = vdwg.mxu0
    %754 = vmatprep.subr.bf16.mxu0 %v652
    %755 = vmatpush1.bf16.msra.mxu0 %v651
    %756 = vmatprep.subr.bf16.mxu0 %v656
    %757 = vmatpush1.bf16.msra.mxu0 %v655
    %758 = vmatprep.subr.bf16.mxu0 %v660
    %759 = vmatpush1.bf16.msra.mxu0 %v659
    %760 = vmatprep.subr.bf16.mxu0 %v664
    %761 = vmatpush1.bf16.msra.mxu0 %v663
    %762 = vmatprep.subr.bf16.mxu0 %v668
    %763 = vmatpush1.bf16.msra.mxu0 %v667
    %764 = vmatprep.subr.bf16.mxu0 %v672
    %765 = vmatpush1.bf16.msra.mxu0 %v671
    %766 = vmatprep.subr.bf16.mxu0 %v676
    %767 = vmatpush1.bf16.msra.mxu0 %v675
    %768 = vmatprep.subr.bf16.mxu0 %v680
    %769 = vmatpush1.bf16.msra.mxu0 %v679
    %770 = vmatprep.subr.bf16.mxu0 0
    %771 = vmatpush1.bf16.msra.mxu0 0
    %772 = vmatprep.subr.bf16.mxu0 0
    %773 = vmatpush1.bf16.msra.mxu0 0
    %774 = vmatprep.subr.bf16.mxu0 0
    %775 = vmatpush1.bf16.msra.mxu0 0
    %776 = vmatprep.subr.bf16.mxu0 0
    %777 = vmatpush1.bf16.msra.mxu0 0
    %778 = vmatprep.subr.bf16.mxu0 0
    %779 = vmatpush1.bf16.msra.mxu0 0
    %780 = vmatprep.subr.bf16.mxu0 0
    %781 = vmatpush1.bf16.msra.mxu0 0
    %782 = vmatprep.subr.bf16.mxu0 0
    %783 = vmatpush1.bf16.msra.mxu0 0
    %784 = vmatprep.subr.bf16.mxu0 0
    %785 = vmatpush1.bf16.msra.mxu0 0
    %786 = vmatprep.mubr.bf16.mxu0 0
    %787 = vmatmul.mubr.bf16.gmra.mrb[0].mxu0 %v498
    %v788 = vpop.f32.mrb[0].mxu0
    %v789 = vadd.f32 %v544, %v788
    %v790 = vpop.f32.mrb[0].mxu0
    %v791 = vadd.f32 %v548, %v790
    %v792 = vpop.f32.mrb[0].mxu0
    %v793 = vpop.f32.mrb[0].mxu0
    %794 = vdwg.mxu0
    %v795 = vmul.f32 %v748, %v750
    %v796 = vld [vmem:[#allocation10] sm:$0xff]
    %v797 = vld [vmem:[#allocation10 + $0x8] sm:$0xff]
    %v798 = vld [vmem:[#allocation10 + $0x10] sm:$0xff]
    %v799 = vld [vmem:[#allocation10 + $0x18] sm:$0xff]
    %v800 = vld [vmem:[#allocation10 + $0x20] sm:$0xff]
    %v801 = vld [vmem:[#allocation10 + $0x28] sm:$0xff]
    %v802 = vld [vmem:[#allocation10 + $0x30] sm:$0xff]
    %v803 = vld [vmem:[#allocation10 + $0x38] sm:$0xff]
    %v804 = vld [vmem:[#allocation10 + $0x40] sm:$0xff]
    %v805 = vld [vmem:[#allocation10 + $0x48] sm:$0xff]
    %v806 = vld [vmem:[#allocation10 + $0x50] sm:$0xff]
    %v807 = vld [vmem:[#allocation10 + $0x58] sm:$0xff]
    %v808 = vld [vmem:[#allocation10 + $0x60] sm:$0xff]
    %v809 = vld [vmem:[#allocation10 + $0x68] sm:$0xff]
    %v810 = vld [vmem:[#allocation10 + $0x70] sm:$0xff]
    %v811 = vld [vmem:[#allocation10 + $0x78] sm:$0xff]
    %v812 = vld [vmem:[#allocation10 + $0x80] sm:$0xff]
    %v813 = vld [vmem:[#allocation10 + $0x88] sm:$0xff]
    %v814 = vld [vmem:[#allocation10 + $0x90] sm:$0xff]
    %v815 = vld [vmem:[#allocation10 + $0x98] sm:$0xff]
    %v816 = vld [vmem:[#allocation10 + $0xa0] sm:$0xff]
    %v817 = vld [vmem:[#allocation10 + $0xa8] sm:$0xff]
    %v818 = vld [vmem:[#allocation10 + $0xb0] sm:$0xff]
    %v819 = vld [vmem:[#allocation10 + $0xb8] sm:$0xff]
    %v820 = vld [vmem:[#allocation10 + $0xc0] sm:$0xff]
    %v821 = vld [vmem:[#allocation10 + $0xc8] sm:$0xff]
    %v822 = vld [vmem:[#allocation10 + $0xd0] sm:$0xff]
    %v823 = vld [vmem:[#allocation10 + $0xd8] sm:$0xff]
    %v824 = vld [vmem:[#allocation10 + $0xe0] sm:$0xff]
    %v825 = vld [vmem:[#allocation10 + $0xe8] sm:$0xff]
    %v826 = vld [vmem:[#allocation10 + $0xf0] sm:$0xff]
    %v827 = vld [vmem:[#allocation10 + $0xf8] sm:$0xff]
    %828 = vmatprep.subr.mxu0 %v797
    %829 = vmatpush1.msra.mxu0 %v796
    %830 = vmatprep.subr.mxu0 %v799
    %831 = vmatpush1.msra.mxu0 %v798
    %832 = vmatprep.subr.mxu0 %v801
    %833 = vmatpush1.msra.mxu0 %v800
    %834 = vmatprep.subr.mxu0 %v803
    %835 = vmatpush1.msra.mxu0 %v802
    %836 = vmatprep.subr.mxu0 %v805
    %837 = vmatpush1.msra.mxu0 %v804
    %838 = vmatprep.subr.mxu0 %v807
    %839 = vmatpush1.msra.mxu0 %v806
    %840 = vmatprep.subr.mxu0 %v809
    %841 = vmatpush1.msra.mxu0 %v808
    %842 = vmatprep.subr.mxu0 %v811
    %843 = vmatpush1.msra.mxu0 %v810
    %844 = vmatprep.subr.mxu0 %v813
    %845 = vmatpush1.msra.mxu0 %v812
    %846 = vmatprep.subr.mxu0 %v815
    %847 = vmatpush1.msra.mxu0 %v814
    %848 = vmatprep.subr.mxu0 %v817
    %849 = vmatpush1.msra.mxu0 %v816
    %850 = vmatprep.subr.mxu0 %v819
    %851 = vmatpush1.msra.mxu0 %v818
    %852 = vmatprep.subr.mxu0 %v821
    %853 = vmatpush1.msra.mxu0 %v820
    %854 = vmatprep.subr.mxu0 %v823
    %855 = vmatpush1.msra.mxu0 %v822
    %856 = vmatprep.subr.mxu0 %v825
    %857 = vmatpush1.msra.mxu0 %v824
    %858 = vmatprep.subr.mxu0 %v827
    %859 = vmatpush1.msra.mxu0 %v826
    %860 = vmatprep.subr.mxu0 0.0
    %861 = vmatpush1.msra.mxu0 0.0
    %862 = vmatprep.subr.mxu0 0.0
    %863 = vmatpush1.msra.mxu0 0.0
    %864 = vmatprep.subr.mxu0 0.0
    %865 = vmatpush1.msra.mxu0 0.0
    %866 = vmatprep.subr.mxu0 0.0
    %867 = vmatpush1.msra.mxu0 0.0
    %868 = vmatprep.subr.mxu0 0.0
    %869 = vmatpush1.msra.mxu0 0.0
    %870 = vmatprep.subr.mxu0 0.0
    %871 = vmatpush1.msra.mxu0 0.0
    %872 = vmatprep.subr.mxu0 0.0
    %873 = vmatpush1.msra.mxu0 0.0
    %874 = vmatprep.subr.mxu0 0.0
    %875 = vmatpush1.msra.mxu0 0.0
    %876 = vmatprep.subr.mxu0 0.0
    %877 = vmatpush1.msra.mxu0 0.0
    %878 = vmatprep.subr.mxu0 0.0
    %879 = vmatpush1.msra.mxu0 0.0
    %880 = vmatprep.subr.mxu0 0.0
    %881 = vmatpush1.msra.mxu0 0.0
    %882 = vmatprep.subr.mxu0 0.0
    %883 = vmatpush1.msra.mxu0 0.0
    %884 = vmatprep.subr.mxu0 0.0
    %885 = vmatpush1.msra.mxu0 0.0
    %886 = vmatprep.subr.mxu0 0.0
    %887 = vmatpush1.msra.mxu0 0.0
    %888 = vmatprep.subr.mxu0 0.0
    %889 = vmatpush1.msra.mxu0 0.0
    %890 = vmatprep.subr.mxu0 0.0
    %891 = vmatpush1.msra.mxu0 0.0
    %892 = vmatprep.mubr.f32.mxu0 0.0
    %893 = vmatmul.mubr.f32.gmra.mrb[0].mxu0 %v795
    %v894 = vpop.f32.mrb[0].mxu0
    %v895 = vadd.f32 0.0, %v894
    %v896 = vpop.f32.mrb[0].mxu0
    %v897 = vadd.f32 0.0, %v896
    %898 = vdwg.mxu0
    %v899 = vmax.f32 %v895, %v897
    %v900 = vsub.f32 %v895, %v899
    %v901 = vmul.f32 %v900, 1.442695
    %v902 = vpow.pop %v901
    %v903 = vsub.f32 %v897, %v899
    %v904 = vmul.f32 %v903, 1.442695
    %v905 = vpow.pop %v904
    %v906 = vadd.f32 %v902, %v905
    %v907 = vrcp.pop %v906
    %v908 = vmul.f32 %v902, %v907
    %v909 = vmul.f32 %v908, %v789
    %v910 = vmul.f32 %v905, %v907
    %v911 = vmul.f32 %v910, %v791
    %v912 = vadd.f32 %v909, %v911
    %v913 = vstv %s174
    %v914 = vmul.f32 %v913, %v912
    %v915 = vmul.f32 %v914, %v914
    %916 = vmatprep.subr.mxu0 0.0
    %917 = vmatpush1.msra.mxu0 %v405
    %918 = vmatprep.subr.mxu0 0.0
    %919 = vmatpush1.msra.mxu0 %v406
    %920 = vmatprep.subr.mxu0 0.0
    %921 = vmatpush1.msra.mxu0 %v407
    %922 = vmatprep.subr.mxu0 0.0
    %923 = vmatpush1.msra.mxu0 %v408
    %924 = vmatprep.subr.mxu0 0.0
    %925 = vmatpush1.msra.mxu0 %v409
    %926 = vmatprep.subr.mxu0 0.0
    %927 = vmatpush1.msra.mxu0 %v410
    %928 = vmatprep.subr.mxu0 0.0
    %929 = vmatpush1.msra.mxu0 %v411
    %930 = vmatprep.subr.mxu0 0.0
    %931 = vmatpush1.msra.mxu0 %v412
    %932 = vmatprep.subr.mxu0 0.0
    %933 = vmatpush1.msra.mxu0 %v413
    %934 = vmatprep.subr.mxu0 0.0
    %935 = vmatpush1.msra.mxu0 %v414
    %936 = vmatprep.subr.mxu0 0.0
    %937 = vmatpush1.msra.mxu0 %v415
    %938 = vmatprep.subr.mxu0 0.0
    %939 = vmatpush1.msra.mxu0 %v416
    %940 = vmatprep.subr.mxu0 0.0
    %941 = vmatpush1.msra.mxu0 %v417
    %942 = vmatprep.subr.mxu0 0.0
    %943 = vmatpush1.msra.mxu0 %v418
    %944 = vmatprep.subr.mxu0 0.0
    %945 = vmatpush1.msra.mxu0 %v419
    %946 = vmatprep.subr.mxu0 0.0
    %947 = vmatpush1.msra.mxu0 %v420
    %948 = vmatprep.subr.mxu0 0.0
    %949 = vmatpush1.msra.mxu0 0.0
    %950 = vmatprep.subr.mxu0 0.0
    %951 = vmatpush1.msra.mxu0 0.0
    %952 = vmatprep.subr.mxu0 0.0
    %953 = vmatpush1.msra.mxu0 0.0
    %954 = vmatprep.subr.mxu0 0.0
    %955 = vmatpush1.msra.mxu0 0.0
    %956 = vmatprep.subr.mxu0 0.0
    %957 = vmatpush1.msra.mxu0 0.0
    %958 = vmatprep.subr.mxu0 0.0
    %959 = vmatpush1.msra.mxu0 0.0
    %960 = vmatprep.subr.mxu0 0.0
    %961 = vmatpush1.msra.mxu0 0.0
    %962 = vmatprep.subr.mxu0 0.0
    %963 = vmatpush1.msra.mxu0 0.0
    %964 = vmatprep.subr.mxu0 0.0
    %965 = vmatpush1.msra.mxu0 0.0
    %966 = vmatprep.subr.mxu0 0.0
    %967 = vmatpush1.msra.mxu0 0.0
    %968 = vmatprep.subr.mxu0 0.0
    %969 = vmatpush1.msra.mxu0 0.0
    %970 = vmatprep.subr.mxu0 0.0
    %971 = vmatpush1.msra.mxu0 0.0
    %972 = vmatprep.subr.mxu0 0.0
    %973 = vmatpush1.msra.mxu0 0.0
    %974 = vmatprep.subr.mxu0 0.0
    %975 = vmatpush1.msra.mxu0 0.0
    %976 = vmatprep.subr.mxu0 0.0
    %977 = vmatpush1.msra.mxu0 0.0
    %978 = vmatprep.subr.mxu0 0.0
    %979 = vmatpush1.msra.mxu0 0.0
    %980 = vmatprep.mubr.f32.mxu0 0.0
    %981 = vmatmul.mubr.f32.gmra.mrb[0].mxu0 %v915
    %v982 = vpop.f32.mrb[0].mxu0
    %v983 = vadd.f32 0.0, %v982
    %v984 = vpop.f32.mrb[0].mxu0
    %985 = vdwg.mxu0
    %v986 = vmax.f32 %v983, 1e-24
    %v987 = vrsqrt.pop %v986
    %v988 = vmul.f32 %v914, %v987
    %v989 = vld [vmem:[%s9] sm:$0xff]
    %v990 = vld [vmem:[%s9 + $0x8] sm:$0xff]
    %v991 = vld [vmem:[%s9 + $0x10] sm:$0xff]
    %v992 = vld [vmem:[%s9 + $0x18] sm:$0xff]
    %v993 = vld [vmem:[%s9 + $0x20] sm:$0xff]
    %v994 = vld [vmem:[%s9 + $0x28] sm:$0xff]
    %v995 = vld [vmem:[%s9 + $0x30] sm:$0xff]
    %v996 = vld [vmem:[%s9 + $0x38] sm:$0xff]
    %v997 = vld [vmem:[%s9 + $0x40] sm:$0xff]
    %v998 = vld [vmem:[%s9 + $0x48] sm:$0xff]
    %v999 = vld [vmem:[%s9 + $0x50] sm:$0xff]
    %v1000 = vld [vmem:[%s9 + $0x58] sm:$0xff]
    %v1001 = vld [vmem:[%s9 + $0x60] sm:$0xff]
    %v1002 = vld [vmem:[%s9 + $0x68] sm:$0xff]
    %v1003 = vld [vmem:[%s9 + $0x70] sm:$0xff]
    %v1004 = vld [vmem:[%s9 + $0x78] sm:$0xff]
    %v1005 = vld [vmem:[%s9 + $0x80] sm:$0xff]
    %v1006 = vld [vmem:[%s9 + $0x88] sm:$0xff]
    %v1007 = vld [vmem:[%s9 + $0x90] sm:$0xff]
    %v1008 = vld [vmem:[%s9 + $0x98] sm:$0xff]
    %v1009 = vld [vmem:[%s9 + $0xa0] sm:$0xff]
    %v1010 = vld [vmem:[%s9 + $0xa8] sm:$0xff]
    %v1011 = vld [vmem:[%s9 + $0xb0] sm:$0xff]
    %v1012 = vld [vmem:[%s9 + $0xb8] sm:$0xff]
    %v1013 = vld [vmem:[%s9 + $0xc0] sm:$0xff]
    %v1014 = vld [vmem:[%s9 + $0xc8] sm:$0xff]
    %v1015 = vld [vmem:[%s9 + $0xd0] sm:$0xff]
    %v1016 = vld [vmem:[%s9 + $0xd8] sm:$0xff]
    %v1017 = vld [vmem:[%s9 + $0xe0] sm:$0xff]
    %v1018 = vld [vmem:[%s9 + $0xe8] sm:$0xff]
    %v1019 = vld [vmem:[%s9 + $0xf0] sm:$0xff]
    %v1020 = vld [vmem:[%s9 + $0xf8] sm:$0xff]
    %v1021 = vld [vmem:[%s9 + $0x100] sm:$0xff]
    %v1022 = vld [vmem:[%s9 + $0x108] sm:$0xff]
    %v1023 = vld [vmem:[%s9 + $0x110] sm:$0xff]
    %v1024 = vld [vmem:[%s9 + $0x118] sm:$0xff]
    %v1025 = vld [vmem:[%s9 + $0x120] sm:$0xff]
    %v1026 = vld [vmem:[%s9 + $0x128] sm:$0xff]
    %v1027 = vld [vmem:[%s9 + $0x130] sm:$0xff]
    %v1028 = vld [vmem:[%s9 + $0x138] sm:$0xff]
    %v1029 = vld [vmem:[%s9 + $0x140] sm:$0xff]
    %v1030 = vld [vmem:[%s9 + $0x148] sm:$0xff]
    %v1031 = vld [vmem:[%s9 + $0x150] sm:$0xff]
    %v1032 = vld [vmem:[%s9 + $0x158] sm:$0xff]
    %v1033 = vld [vmem:[%s9 + $0x160] sm:$0xff]
    %v1034 = vld [vmem:[%s9 + $0x168] sm:$0xff]
    %v1035 = vld [vmem:[%s9 + $0x170] sm:$0xff]
    %v1036 = vld [vmem:[%s9 + $0x178] sm:$0xff]
    %v1037 = vld [vmem:[%s9 + $0x180] sm:$0xff]
    %v1038 = vld [vmem:[%s9 + $0x188] sm:$0xff]
    %v1039 = vld [vmem:[%s9 + $0x190] sm:$0xff]
    %v1040 = vld [vmem:[%s9 + $0x198] sm:$0xff]
    %v1041 = vld [vmem:[%s9 + $0x1a0] sm:$0xff]
    %v1042 = vld [vmem:[%s9 + $0x1a8] sm:$0xff]
    %v1043 = vld [vmem:[%s9 + $0x1b0] sm:$0xff]
    %v1044 = vld [vmem:[%s9 + $0x1b8] sm:$0xff]
    %v1045 = vld [vmem:[%s9 + $0x1c0] sm:$0xff]
    %v1046 = vld [vmem:[%s9 + $0x1c8] sm:$0xff]
    %v1047 = vld [vmem:[%s9 + $0x1d0] sm:$0xff]
    %v1048 = vld [vmem:[%s9 + $0x1d8] sm:$0xff]
    %v1049 = vld [vmem:[%s9 + $0x1e0] sm:$0xff]
    %v1050 = vld [vmem:[%s9 + $0x1e8] sm:$0xff]
    %v1051 = vld [vmem:[%s9 + $0x1f0] sm:$0xff]
    %v1052 = vld [vmem:[%s9 + $0x1f8] sm:$0xff]
    %v1053 = vld [vmem:[#allocation11] sm:$0xff]
    %v1054 = vld [vmem:[#allocation11 + $0x8] sm:$0xff]
    %v1055 = vld [vmem:[#allocation11 + $0x10] sm:$0xff]
    %v1056 = vld [vmem:[#allocation11 + $0x18] sm:$0xff]
    %v1057 = vld [vmem:[#allocation11 + $0x20] sm:$0xff]
    %v1058 = vld [vmem:[#allocation11 + $0x28] sm:$0xff]
    %v1059 = vld [vmem:[#allocation11 + $0x30] sm:$0xff]
    %v1060 = vld [vmem:[#allocation11 + $0x38] sm:$0xff]
    %v1061 = vld [vmem:[#allocation11 + $0x40] sm:$0xff]
    %v1062 = vld [vmem:[#allocation11 + $0x48] sm:$0xff]
    %v1063 = vld [vmem:[#allocation11 + $0x50] sm:$0xff]
    %v1064 = vld [vmem:[#allocation11 + $0x58] sm:$0xff]
    %v1065 = vld [vmem:[#allocation11 + $0x60] sm:$0xff]
    %v1066 = vld [vmem:[#allocation11 + $0x68] sm:$0xff]
    %v1067 = vld [vmem:[#allocation11 + $0x70] sm:$0xff]
    %v1068 = vld [vmem:[#allocation11 + $0x78] sm:$0xff]
    %v1069 = vld [vmem:[#allocation11 + $0x80] sm:$0xff]
    %v1070 = vld [vmem:[#allocation11 + $0x88] sm:$0xff]
    %v1071 = vld [vmem:[#allocation11 + $0x90] sm:$0xff]
    %v1072 = vld [vmem:[#allocation11 + $0x98] sm:$0xff]
    %v1073 = vld [vmem:[#allocation11 + $0xa0] sm:$0xff]
    %v1074 = vld [vmem:[#allocation11 + $0xa8] sm:$0xff]
    %v1075 = vld [vmem:[#allocation11 + $0xb0] sm:$0xff]
    %v1076 = vld [vmem:[#allocation11 + $0xb8] sm:$0xff]
    %v1077 = vld [vmem:[#allocation11 + $0xc0] sm:$0xff]
    %v1078 = vld [vmem:[#allocation11 + $0xc8] sm:$0xff]
    %v1079 = vld [vmem:[#allocation11 + $0xd0] sm:$0xff]
    %v1080 = vld [vmem:[#allocation11 + $0xd8] sm:$0xff]
    %v1081 = vld [vmem:[#allocation11 + $0xe0] sm:$0xff]
    %v1082 = vld [vmem:[#allocation11 + $0xe8] sm:$0xff]
    %v1083 = vld [vmem:[#allocation11 + $0xf0] sm:$0xff]
    %v1084 = vld [vmem:[#allocation11 + $0xf8] sm:$0xff]
    %v1085 = vld [vmem:[#allocation11 + $0x100] sm:$0xff]
    %v1086 = vld [vmem:[#allocation11 + $0x108] sm:$0xff]
    %v1087 = vld [vmem:[#allocation11 + $0x110] sm:$0xff]
    %v1088 = vld [vmem:[#allocation11 + $0x118] sm:$0xff]
    %v1089 = vld [vmem:[#allocation11 + $0x120] sm:$0xff]
    %v1090 = vld [vmem:[#allocation11 + $0x128] sm:$0xff]
    %v1091 = vld [vmem:[#allocation11 + $0x130] sm:$0xff]
    %v1092 = vld [vmem:[#allocation11 + $0x138] sm:$0xff]
    %v1093 = vld [vmem:[#allocation11 + $0x140] sm:$0xff]
    %v1094 = vld [vmem:[#allocation11 + $0x148] sm:$0xff]
    %v1095 = vld [vmem:[#allocation11 + $0x150] sm:$0xff]
    %v1096 = vld [vmem:[#allocation11 + $0x158] sm:$0xff]
    %v1097 = vld [vmem:[#allocation11 + $0x160] sm:$0xff]
    %v1098 = vld [vmem:[#allocation11 + $0x168] sm:$0xff]
    %v1099 = vld [vmem:[#allocation11 + $0x170] sm:$0xff]
    %v1100 = vld [vmem:[#allocation11 + $0x178] sm:$0xff]
    %v1101 = vld [vmem:[#allocation11 + $0x180] sm:$0xff]
    %v1102 = vld [vmem:[#allocation11 + $0x188] sm:$0xff]
    %v1103 = vld [vmem:[#allocation11 + $0x190] sm:$0xff]
    %v1104 = vld [vmem:[#allocation11 + $0x198] sm:$0xff]
    %v1105 = vld [vmem:[#allocation11 + $0x1a0] sm:$0xff]
    %v1106 = vld [vmem:[#allocation11 + $0x1a8] sm:$0xff]
    %v1107 = vld [vmem:[#allocation11 + $0x1b0] sm:$0xff]
    %v1108 = vld [vmem:[#allocation11 + $0x1b8] sm:$0xff]
    %v1109 = vld [vmem:[#allocation11 + $0x1c0] sm:$0xff]
    %v1110 = vld [vmem:[#allocation11 + $0x1c8] sm:$0xff]
    %v1111 = vld [vmem:[#allocation11 + $0x1d0] sm:$0xff]
    %v1112 = vld [vmem:[#allocation11 + $0x1d8] sm:$0xff]
    %v1113 = vld [vmem:[#allocation11 + $0x1e0] sm:$0xff]
    %v1114 = vld [vmem:[#allocation11 + $0x1e8] sm:$0xff]
    %v1115 = vld [vmem:[#allocation11 + $0x1f0] sm:$0xff]
    %v1116 = vld [vmem:[#allocation11 + $0x1f8] sm:$0xff]
    %1117 = vmatprep.subr.mxu0 %v1054
    %1118 = vmatpush1.msra.mxu0 %v1053
    %1119 = vmatprep.subr.mxu0 %v1058
    %1120 = vmatpush1.msra.mxu0 %v1057
    %1121 = vmatprep.subr.mxu0 %v1062
    %1122 = vmatpush1.msra.mxu0 %v1061
    %1123 = vmatprep.subr.mxu0 %v1066
    %1124 = vmatpush1.msra.mxu0 %v1065
    %1125 = vmatprep.subr.mxu0 %v1070
    %1126 = vmatpush1.msra.mxu0 %v1069
    %1127 = vmatprep.subr.mxu0 %v1074
    %1128 = vmatpush1.msra.mxu0 %v1073
    %1129 = vmatprep.subr.mxu0 %v1078
    %1130 = vmatpush1.msra.mxu0 %v1077
    %1131 = vmatprep.subr.mxu0 %v1082
    %1132 = vmatpush1.msra.mxu0 %v1081
    %1133 = vmatprep.subr.mxu0 %v1086
    %1134 = vmatpush1.msra.mxu0 %v1085
    %1135 = vmatprep.subr.mxu0 %v1090
    %1136 = vmatpush1.msra.mxu0 %v1089
    %1137 = vmatprep.subr.mxu0 %v1094
    %1138 = vmatpush1.msra.mxu0 %v1093
    %1139 = vmatprep.subr.mxu0 %v1098
    %1140 = vmatpush1.msra.mxu0 %v1097
    %1141 = vmatprep.subr.mxu0 %v1102
    %1142 = vmatpush1.msra.mxu0 %v1101
    %1143 = vmatprep.subr.mxu0 %v1106
    %1144 = vmatpush1.msra.mxu0 %v1105
    %1145 = vmatprep.subr.mxu0 %v1110
    %1146 = vmatpush1.msra.mxu0 %v1109
    %1147 = vmatprep.subr.mxu0 %v1114
    %1148 = vmatpush1.msra.mxu0 %v1113
    %1149 = vmatprep.subr.mxu0 0.0
    %1150 = vmatpush1.msra.mxu0 0.0
    %1151 = vmatprep.subr.mxu0 0.0
    %1152 = vmatpush1.msra.mxu0 0.0
    %1153 = vmatprep.subr.mxu0 0.0
    %1154 = vmatpush1.msra.mxu0 0.0
    %1155 = vmatprep.subr.mxu0 0.0
    %1156 = vmatpush1.msra.mxu0 0.0
    %1157 = vmatprep.subr.mxu0 0.0
    %1158 = vmatpush1.msra.mxu0 0.0
    %1159 = vmatprep.subr.mxu0 0.0
    %1160 = vmatpush1.msra.mxu0 0.0
    %1161 = vmatprep.subr.mxu0 0.0
    %1162 = vmatpush1.msra.mxu0 0.0
    %1163 = vmatprep.subr.mxu0 0.0
    %1164 = vmatpush1.msra.mxu0 0.0
    %1165 = vmatprep.subr.mxu0 0.0
    %1166 = vmatpush1.msra.mxu0 0.0
    %1167 = vmatprep.subr.mxu0 0.0
    %1168 = vmatpush1.msra.mxu0 0.0
    %1169 = vmatprep.subr.mxu0 0.0
    %1170 = vmatpush1.msra.mxu0 0.0
    %1171 = vmatprep.subr.mxu0 0.0
    %1172 = vmatpush1.msra.mxu0 0.0
    %1173 = vmatprep.subr.mxu0 0.0
    %1174 = vmatpush1.msra.mxu0 0.0
    %1175 = vmatprep.subr.mxu0 0.0
    %1176 = vmatpush1.msra.mxu0 0.0
    %1177 = vmatprep.subr.mxu0 0.0
    %1178 = vmatpush1.msra.mxu0 0.0
    %1179 = vmatprep.subr.mxu0 0.0
    %1180 = vmatpush1.msra.mxu0 0.0
    %1181 = vmatprep.mubr.f32.mxu0 0.0
    %1182 = vmatmul.mubr.f32.gmra.mrb[0].mxu0 %v988
    %v1183 = vpop.f32.mrb[0].mxu0
    %v1184 = vadd.f32 0.0, %v1183
    %v1185 = vpop.f32.mrb[0].mxu0
    %v1186 = vadd.f32 0.0, %v1185
    %1187 = vdwg.mxu0
    %1188 = vmatprep.subr.mxu0 %v1056
    %1189 = vmatpush1.msra.mxu0 %v1055
    %1190 = vmatprep.subr.mxu0 %v1060
    %1191 = vmatpush1.msra.mxu0 %v1059
    %1192 = vmatprep.subr.mxu0 %v1064
    %1193 = vmatpush1.msra.mxu0 %v1063
    %1194 = vmatprep.subr.mxu0 %v1068
    %1195 = vmatpush1.msra.mxu0 %v1067
    %1196 = vmatprep.subr.mxu0 %v1072
    %1197 = vmatpush1.msra.mxu0 %v1071
    %1198 = vmatprep.subr.mxu0 %v1076
    %1199 = vmatpush1.msra.mxu0 %v1075
    %1200 = vmatprep.subr.mxu0 %v1080
    %1201 = vmatpush1.msra.mxu0 %v1079
    %1202 = vmatprep.subr.mxu0 %v1084
    %1203 = vmatpush1.msra.mxu0 %v1083
    %1204 = vmatprep.subr.mxu0 %v1088
    %1205 = vmatpush1.msra.mxu0 %v1087
    %1206 = vmatprep.subr.mxu0 %v1092
    %1207 = vmatpush1.msra.mxu0 %v1091
    %1208 = vmatprep.subr.mxu0 %v1096
    %1209 = vmatpush1.msra.mxu0 %v1095
    %1210 = vmatprep.subr.mxu0 %v1100
    %1211 = vmatpush1.msra.mxu0 %v1099
    %1212 = vmatprep.subr.mxu0 %v1104
    %1213 = vmatpush1.msra.mxu0 %v1103
    %1214 = vmatprep.subr.mxu0 %v1108
    %1215 = vmatpush1.msra.mxu0 %v1107
    %1216 = vmatprep.subr.mxu0 %v1112
    %1217 = vmatpush1.msra.mxu0 %v1111
    %1218 = vmatprep.subr.mxu0 %v1116
    %1219 = vmatpush1.msra.mxu0 %v1115
    %1220 = vmatprep.subr.mxu0 0.0
    %1221 = vmatpush1.msra.mxu0 0.0
    %1222 = vmatprep.subr.mxu0 0.0
    %1223 = vmatpush1.msra.mxu0 0.0
    %1224 = vmatprep.subr.mxu0 0.0
    %1225 = vmatpush1.msra.mxu0 0.0
    %1226 = vmatprep.subr.mxu0 0.0
    %1227 = vmatpush1.msra.mxu0 0.0
    %1228 = vmatprep.subr.mxu0 0.0
    %1229 = vmatpush1.msra.mxu0 0.0
    %1230 = vmatprep.subr.mxu0 0.0
    %1231 = vmatpush1.msra.mxu0 0.0
    %1232 = vmatprep.subr.mxu0 0.0
    %1233 = vmatpush1.msra.mxu0 0.0
    %1234 = vmatprep.subr.mxu0 0.0
    %1235 = vmatpush1.msra.mxu0 0.0
    %1236 = vmatprep.subr.mxu0 0.0
    %1237 = vmatpush1.msra.mxu0 0.0
    %1238 = vmatprep.subr.mxu0 0.0
    %1239 = vmatpush1.msra.mxu0 0.0
    %1240 = vmatprep.subr.mxu0 0.0
    %1241 = vmatpush1.msra.mxu0 0.0
    %1242 = vmatprep.subr.mxu0 0.0
    %1243 = vmatpush1.msra.mxu0 0.0
    %1244 = vmatprep.subr.mxu0 0.0
    %1245 = vmatpush1.msra.mxu0 0.0
    %1246 = vmatprep.subr.mxu0 0.0
    %1247 = vmatpush1.msra.mxu0 0.0
    %1248 = vmatprep.subr.mxu0 0.0
    %1249 = vmatpush1.msra.mxu0 0.0
    %1250 = vmatprep.subr.mxu0 0.0
    %1251 = vmatpush1.msra.mxu0 0.0
    %1252 = vmatprep.mubr.f32.mxu0 0.0
    %1253 = vmatmul.mubr.f32.gmra.mrb[0].mxu0 %v988
    %v1254 = vpop.f32.mrb[0].mxu0
    %v1255 = vadd.f32 0.0, %v1254
    %v1256 = vpop.f32.mrb[0].mxu0
    %v1257 = vadd.f32 0.0, %v1256
    %1258 = vdwg.mxu0
    %1259 = vmatprep.subr.mxu0 %v990
    %1260 = vmatpush1.msra.mxu0 %v989
    %1261 = vmatprep.subr.mxu0 %v994
    %1262 = vmatpush1.msra.mxu0 %v993
    %1263 = vmatprep.subr.mxu0 %v998
    %1264 = vmatpush1.msra.mxu0 %v997
    %1265 = vmatprep.subr.mxu0 %v1002
    %1266 = vmatpush1.msra.mxu0 %v1001
    %1267 = vmatprep.subr.mxu0 %v1006
    %1268 = vmatpush1.msra.mxu0 %v1005
    %1269 = vmatprep.subr.mxu0 %v1010
    %1270 = vmatpush1.msra.mxu0 %v1009
    %1271 = vmatprep.subr.mxu0 %v1014
    %1272 = vmatpush1.msra.mxu0 %v1013
    %1273 = vmatprep.subr.mxu0 %v1018
    %1274 = vmatpush1.msra.mxu0 %v1017
    %1275 = vmatprep.subr.mxu0 %v1022
    %1276 = vmatpush1.msra.mxu0 %v1021
    %1277 = vmatprep.subr.mxu0 %v1026
    %1278 = vmatpush1.msra.mxu0 %v1025
    %1279 = vmatprep.subr.mxu0 %v1030
    %1280 = vmatpush1.msra.mxu0 %v1029
    %1281 = vmatprep.subr.mxu0 %v1034
    %1282 = vmatpush1.msra.mxu0 %v1033
    %1283 = vmatprep.subr.mxu0 %v1038
    %1284 = vmatpush1.msra.mxu0 %v1037
    %1285 = vmatprep.subr.mxu0 %v1042
    %1286 = vmatpush1.msra.mxu0 %v1041
    %1287 = vmatprep.subr.mxu0 %v1046
    %1288 = vmatpush1.msra.mxu0 %v1045
    %1289 = vmatprep.subr.mxu0 %v1050
    %1290 = vmatpush1.msra.mxu0 %v1049
    %1291 = vmatprep.subr.mxu0 0.0
    %1292 = vmatpush1.msra.mxu0 0.0
    %1293 = vmatprep.subr.mxu0 0.0
    %1294 = vmatpush1.msra.mxu0 0.0
    %1295 = vmatprep.subr.mxu0 0.0
    %1296 = vmatpush1.msra.mxu0 0.0
    %1297 = vmatprep.subr.mxu0 0.0
    %1298 = vmatpush1.msra.mxu0 0.0
    %1299 = vmatprep.subr.mxu0 0.0
    %1300 = vmatpush1.msra.mxu0 0.0
    %1301 = vmatprep.subr.mxu0 0.0
    %1302 = vmatpush1.msra.mxu0 0.0
    %1303 = vmatprep.subr.mxu0 0.0
    %1304 = vmatpush1.msra.mxu0 0.0
    %1305 = vmatprep.subr.mxu0 0.0
    %1306 = vmatpush1.msra.mxu0 0.0
    %1307 = vmatprep.subr.mxu0 0.0
    %1308 = vmatpush1.msra.mxu0 0.0
    %1309 = vmatprep.subr.mxu0 0.0
    %1310 = vmatpush1.msra.mxu0 0.0
    %1311 = vmatprep.subr.mxu0 0.0
    %1312 = vmatpush1.msra.mxu0 0.0
    %1313 = vmatprep.subr.mxu0 0.0
    %1314 = vmatpush1.msra.mxu0 0.0
    %1315 = vmatprep.subr.mxu0 0.0
    %1316 = vmatpush1.msra.mxu0 0.0
    %1317 = vmatprep.subr.mxu0 0.0
    %1318 = vmatpush1.msra.mxu0 0.0
    %1319 = vmatprep.subr.mxu0 0.0
    %1320 = vmatpush1.msra.mxu0 0.0
    %1321 = vmatprep.subr.mxu0 0.0
    %1322 = vmatpush1.msra.mxu0 0.0
    %1323 = vmatprep.mubr.f32.mxu0 0.0
    %1324 = vmatmul.mubr.f32.gmra.mrb[0].mxu0 %v497
    %v1325 = vpop.f32.mrb[0].mxu0
    %v1326 = vadd.f32 %v1184, %v1325
    %v1327 = vpop.f32.mrb[0].mxu0
    %v1328 = vadd.f32 %v1186, %v1327
    %1329 = vdwg.mxu0
    %1330 = vmatprep.subr.mxu0 %v992
    %1331 = vmatpush1.msra.mxu0 %v991
    %1332 = vmatprep.subr.mxu0 %v996
    %1333 = vmatpush1.msra.mxu0 %v995
    %1334 = vmatprep.subr.mxu0 %v1000
    %1335 = vmatpush1.msra.mxu0 %v999
    %1336 = vmatprep.subr.mxu0 %v1004
    %1337 = vmatpush1.msra.mxu0 %v1003
    %1338 = vmatprep.subr.mxu0 %v1008
    %1339 = vmatpush1.msra.mxu0 %v1007
    %1340 = vmatprep.subr.mxu0 %v1012
    %1341 = vmatpush1.msra.mxu0 %v1011
    %1342 = vmatprep.subr.mxu0 %v1016
    %1343 = vmatpush1.msra.mxu0 %v1015
    %1344 = vmatprep.subr.mxu0 %v1020
    %1345 = vmatpush1.msra.mxu0 %v1019
    %1346 = vmatprep.subr.mxu0 %v1024
    %1347 = vmatpush1.msra.mxu0 %v1023
    %1348 = vmatprep.subr.mxu0 %v1028
    %1349 = vmatpush1.msra.mxu0 %v1027
    %1350 = vmatprep.subr.mxu0 %v1032
    %1351 = vmatpush1.msra.mxu0 %v1031
    %1352 = vmatprep.subr.mxu0 %v1036
    %1353 = vmatpush1.msra.mxu0 %v1035
    %1354 = vmatprep.subr.mxu0 %v1040
    %1355 = vmatpush1.msra.mxu0 %v1039
    %1356 = vmatprep.subr.mxu0 %v1044
    %1357 = vmatpush1.msra.mxu0 %v1043
    %1358 = vmatprep.subr.mxu0 %v1048
    %1359 = vmatpush1.msra.mxu0 %v1047
    %1360 = vmatprep.subr.mxu0 %v1052
    %1361 = vmatpush1.msra.mxu0 %v1051
    %1362 = vmatprep.subr.mxu0 0.0
    %1363 = vmatpush1.msra.mxu0 0.0
    %1364 = vmatprep.subr.mxu0 0.0
    %1365 = vmatpush1.msra.mxu0 0.0
    %1366 = vmatprep.subr.mxu0 0.0
    %1367 = vmatpush1.msra.mxu0 0.0
    %1368 = vmatprep.subr.mxu0 0.0
    %1369 = vmatpush1.msra.mxu0 0.0
    %1370 = vmatprep.subr.mxu0 0.0
    %1371 = vmatpush1.msra.mxu0 0.0
    %1372 = vmatprep.subr.mxu0 0.0
    %1373 = vmatpush1.msra.mxu0 0.0
    %1374 = vmatprep.subr.mxu0 0.0
    %1375 = vmatpush1.msra.mxu0 0.0
    %1376 = vmatprep.subr.mxu0 0.0
    %1377 = vmatpush1.msra.mxu0 0.0
    %1378 = vmatprep.subr.mxu0 0.0
    %1379 = vmatpush1.msra.mxu0 0.0
    %1380 = vmatprep.subr.mxu0 0.0
    %1381 = vmatpush1.msra.mxu0 0.0
    %1382 = vmatprep.subr.mxu0 0.0
    %1383 = vmatpush1.msra.mxu0 0.0
    %1384 = vmatprep.subr.mxu0 0.0
    %1385 = vmatpush1.msra.mxu0 0.0
    %1386 = vmatprep.subr.mxu0 0.0
    %1387 = vmatpush1.msra.mxu0 0.0
    %1388 = vmatprep.subr.mxu0 0.0
    %1389 = vmatpush1.msra.mxu0 0.0
    %1390 = vmatprep.subr.mxu0 0.0
    %1391 = vmatpush1.msra.mxu0 0.0
    %1392 = vmatprep.subr.mxu0 0.0
    %1393 = vmatpush1.msra.mxu0 0.0
    %1394 = vmatprep.mubr.f32.mxu0 0.0
    %1395 = vmatmul.mubr.f32.gmra.mrb[0].mxu0 %v497
    %v1396 = vpop.f32.mrb[0].mxu0
    %v1397 = vadd.f32 %v1255, %v1396
    %v1398 = vpop.f32.mrb[0].mxu0
    %v1399 = vadd.f32 %v1257, %v1398
    %1400 = vdwg.mxu0
    %v1401 = vld [vmem:[#allocation13] sm:$0xff]
    %v1402 = vld [vmem:[#allocation13 + $0x8] sm:$0xff]
    %v1403 = vld [vmem:[#allocation13 + $0x10] sm:$0xff]
    %v1404 = vld [vmem:[#allocation13 + $0x18] sm:$0xff]
    %v1405 = vld [vmem:[#allocation13 + $0x20] sm:$0xff]
    %v1406 = vld [vmem:[#allocation13 + $0x28] sm:$0xff]
    %v1407 = vld [vmem:[#allocation13 + $0x30] sm:$0xff]
    %v1408 = vld [vmem:[#allocation13 + $0x38] sm:$0xff]
    %v1409 = vld [vmem:[#allocation13 + $0x40] sm:$0xff]
    %v1410 = vld [vmem:[#allocation13 + $0x48] sm:$0xff]
    %v1411 = vld [vmem:[#allocation13 + $0x50] sm:$0xff]
    %v1412 = vld [vmem:[#allocation13 + $0x58] sm:$0xff]
    %v1413 = vld [vmem:[#allocation13 + $0x60] sm:$0xff]
    %v1414 = vld [vmem:[#allocation13 + $0x68] sm:$0xff]
    %v1415 = vld [vmem:[#allocation13 + $0x70] sm:$0xff]
    %v1416 = vld [vmem:[#allocation13 + $0x78] sm:$0xff]
    %v1417 = vld [vmem:[#allocation13 + $0x80] sm:$0xff]
    %v1418 = vld [vmem:[#allocation13 + $0x88] sm:$0xff]
    %v1419 = vld [vmem:[#allocation13 + $0x90] sm:$0xff]
    %v1420 = vld [vmem:[#allocation13 + $0x98] sm:$0xff]
    %v1421 = vld [vmem:[#allocation13 + $0xa0] sm:$0xff]
    %v1422 = vld [vmem:[#allocation13 + $0xa8] sm:$0xff]
    %v1423 = vld [vmem:[#allocation13 + $0xb0] sm:$0xff]
    %v1424 = vld [vmem:[#allocation13 + $0xb8] sm:$0xff]
    %v1425 = vld [vmem:[#allocation13 + $0xc0] sm:$0xff]
    %v1426 = vld [vmem:[#allocation13 + $0xc8] sm:$0xff]
    %v1427 = vld [vmem:[#allocation13 + $0xd0] sm:$0xff]
    %v1428 = vld [vmem:[#allocation13 + $0xd8] sm:$0xff]
    %v1429 = vld [vmem:[#allocation13 + $0xe0] sm:$0xff]
    %v1430 = vld [vmem:[#allocation13 + $0xe8] sm:$0xff]
    %v1431 = vld [vmem:[#allocation13 + $0xf0] sm:$0xff]
    %v1432 = vld [vmem:[#allocation13 + $0xf8] sm:$0xff]
    %v1433 = vld [vmem:[#allocation13 + $0x100] sm:$0xff]
    %v1434 = vld [vmem:[#allocation13 + $0x108] sm:$0xff]
    %v1435 = vld [vmem:[#allocation13 + $0x110] sm:$0xff]
    %v1436 = vld [vmem:[#allocation13 + $0x118] sm:$0xff]
    %v1437 = vld [vmem:[#allocation13 + $0x120] sm:$0xff]
    %v1438 = vld [vmem:[#allocation13 + $0x128] sm:$0xff]
    %v1439 = vld [vmem:[#allocation13 + $0x130] sm:$0xff]
    %v1440 = vld [vmem:[#allocation13 + $0x138] sm:$0xff]
    %v1441 = vld [vmem:[#allocation13 + $0x140] sm:$0xff]
    %v1442 = vld [vmem:[#allocation13 + $0x148] sm:$0xff]
    %v1443 = vld [vmem:[#allocation13 + $0x150] sm:$0xff]
    %v1444 = vld [vmem:[#allocation13 + $0x158] sm:$0xff]
    %v1445 = vld [vmem:[#allocation13 + $0x160] sm:$0xff]
    %v1446 = vld [vmem:[#allocation13 + $0x168] sm:$0xff]
    %v1447 = vld [vmem:[#allocation13 + $0x170] sm:$0xff]
    %v1448 = vld [vmem:[#allocation13 + $0x178] sm:$0xff]
    %v1449 = vld [vmem:[#allocation13 + $0x180] sm:$0xff]
    %v1450 = vld [vmem:[#allocation13 + $0x188] sm:$0xff]
    %v1451 = vld [vmem:[#allocation13 + $0x190] sm:$0xff]
    %v1452 = vld [vmem:[#allocation13 + $0x198] sm:$0xff]
    %v1453 = vld [vmem:[#allocation13 + $0x1a0] sm:$0xff]
    %v1454 = vld [vmem:[#allocation13 + $0x1a8] sm:$0xff]
    %v1455 = vld [vmem:[#allocation13 + $0x1b0] sm:$0xff]
    %v1456 = vld [vmem:[#allocation13 + $0x1b8] sm:$0xff]
    %v1457 = vld [vmem:[#allocation13 + $0x1c0] sm:$0xff]
    %v1458 = vld [vmem:[#allocation13 + $0x1c8] sm:$0xff]
    %v1459 = vld [vmem:[#allocation13 + $0x1d0] sm:$0xff]
    %v1460 = vld [vmem:[#allocation13 + $0x1d8] sm:$0xff]
    %v1461 = vld [vmem:[#allocation13 + $0x1e0] sm:$0xff]
    %v1462 = vld [vmem:[#allocation13 + $0x1e8] sm:$0xff]
    %v1463 = vld [vmem:[#allocation13 + $0x1f0] sm:$0xff]
    %v1464 = vld [vmem:[#allocation13 + $0x1f8] sm:$0xff]
    %v1465 = vld [vmem:[#allocation14] sm:$0xff]
    %v1466 = vld [vmem:[#allocation14 + $0x8] sm:$0xff]
    %v1467 = vld [vmem:[#allocation14 + $0x10] sm:$0xff]
    %v1468 = vld [vmem:[#allocation14 + $0x18] sm:$0xff]
    %v1469 = vld [vmem:[#allocation14 + $0x20] sm:$0xff]
    %v1470 = vld [vmem:[#allocation14 + $0x28] sm:$0xff]
    %v1471 = vld [vmem:[#allocation14 + $0x30] sm:$0xff]
    %v1472 = vld [vmem:[#allocation14 + $0x38] sm:$0xff]
    %v1473 = vld [vmem:[#allocation14 + $0x40] sm:$0xff]
    %v1474 = vld [vmem:[#allocation14 + $0x48] sm:$0xff]
    %v1475 = vld [vmem:[#allocation14 + $0x50] sm:$0xff]
    %v1476 = vld [vmem:[#allocation14 + $0x58] sm:$0xff]
    %v1477 = vld [vmem:[#allocation14 + $0x60] sm:$0xff]
    %v1478 = vld [vmem:[#allocation14 + $0x68] sm:$0xff]
    %v1479 = vld [vmem:[#allocation14 + $0x70] sm:$0xff]
    %v1480 = vld [vmem:[#allocation14 + $0x78] sm:$0xff]
    %v1481 = vld [vmem:[#allocation14 + $0x80] sm:$0xff]
    %v1482 = vld [vmem:[#allocation14 + $0x88] sm:$0xff]
    %v1483 = vld [vmem:[#allocation14 + $0x90] sm:$0xff]
    %v1484 = vld [vmem:[#allocation14 + $0x98] sm:$0xff]
    %v1485 = vld [vmem:[#allocation14 + $0xa0] sm:$0xff]
    %v1486 = vld [vmem:[#allocation14 + $0xa8] sm:$0xff]
    %v1487 = vld [vmem:[#allocation14 + $0xb0] sm:$0xff]
    %v1488 = vld [vmem:[#allocation14 + $0xb8] sm:$0xff]
    %v1489 = vld [vmem:[#allocation14 + $0xc0] sm:$0xff]
    %v1490 = vld [vmem:[#allocation14 + $0xc8] sm:$0xff]
    %v1491 = vld [vmem:[#allocation14 + $0xd0] sm:$0xff]
    %v1492 = vld [vmem:[#allocation14 + $0xd8] sm:$0xff]
    %v1493 = vld [vmem:[#allocation14 + $0xe0] sm:$0xff]
    %v1494 = vld [vmem:[#allocation14 + $0xe8] sm:$0xff]
    %v1495 = vld [vmem:[#allocation14 + $0xf0] sm:$0xff]
    %v1496 = vld [vmem:[#allocation14 + $0xf8] sm:$0xff]
    %v1497 = vld [vmem:[#allocation14 + $0x100] sm:$0xff]
    %v1498 = vld [vmem:[#allocation14 + $0x108] sm:$0xff]
    %v1499 = vld [vmem:[#allocation14 + $0x110] sm:$0xff]
    %v1500 = vld [vmem:[#allocation14 + $0x118] sm:$0xff]
    %v1501 = vld [vmem:[#allocation14 + $0x120] sm:$0xff]
    %v1502 = vld [vmem:[#allocation14 + $0x128] sm:$0xff]
    %v1503 = vld [vmem:[#allocation14 + $0x130] sm:$0xff]
    %v1504 = vld [vmem:[#allocation14 + $0x138] sm:$0xff]
    %v1505 = vld [vmem:[#allocation14 + $0x140] sm:$0xff]
    %v1506 = vld [vmem:[#allocation14 + $0x148] sm:$0xff]
    %v1507 = vld [vmem:[#allocation14 + $0x150] sm:$0xff]
    %v1508 = vld [vmem:[#allocation14 + $0x158] sm:$0xff]
    %v1509 = vld [vmem:[#allocation14 + $0x160] sm:$0xff]
    %v1510 = vld [vmem:[#allocation14 + $0x168] sm:$0xff]
    %v1511 = vld [vmem:[#allocation14 + $0x170] sm:$0xff]
    %v1512 = vld [vmem:[#allocation14 + $0x178] sm:$0xff]
    %v1513 = vld [vmem:[#allocation14 + $0x180] sm:$0xff]
    %v1514 = vld [vmem:[#allocation14 + $0x188] sm:$0xff]
    %v1515 = vld [vmem:[#allocation14 + $0x190] sm:$0xff]
    %v1516 = vld [vmem:[#allocation14 + $0x198] sm:$0xff]
    %v1517 = vld [vmem:[#allocation14 + $0x1a0] sm:$0xff]
    %v1518 = vld [vmem:[#allocation14 + $0x1a8] sm:$0xff]
    %v1519 = vld [vmem:[#allocation14 + $0x1b0] sm:$0xff]
    %v1520 = vld [vmem:[#allocation14 + $0x1b8] sm:$0xff]
    %v1521 = vld [vmem:[#allocation14 + $0x1c0] sm:$0xff]
    %v1522 = vld [vmem:[#allocation14 + $0x1c8] sm:$0xff]
    %v1523 = vld [vmem:[#allocation14 + $0x1d0] sm:$0xff]
    %v1524 = vld [vmem:[#allocation14 + $0x1d8] sm:$0xff]
    %v1525 = vld [vmem:[#allocation14 + $0x1e0] sm:$0xff]
    %v1526 = vld [vmem:[#allocation14 + $0x1e8] sm:$0xff]
    %v1527 = vld [vmem:[#allocation14 + $0x1f0] sm:$0xff]
    %v1528 = vld [vmem:[#allocation14 + $0x1f8] sm:$0xff]
    %1529 = vmatprep.subr.mxu0 %v1466
    %1530 = vmatpush1.msra.mxu0 %v1465
    %1531 = vmatprep.subr.mxu0 %v1470
    %1532 = vmatpush1.msra.mxu0 %v1469
    %1533 = vmatprep.subr.mxu0 %v1474
    %1534 = vmatpush1.msra.mxu0 %v1473
    %1535 = vmatprep.subr.mxu0 %v1478
    %1536 = vmatpush1.msra.mxu0 %v1477
    %1537 = vmatprep.subr.mxu0 %v1482
    %1538 = vmatpush1.msra.mxu0 %v1481
    %1539 = vmatprep.subr.mxu0 %v1486
    %1540 = vmatpush1.msra.mxu0 %v1485
    %1541 = vmatprep.subr.mxu0 %v1490
    %1542 = vmatpush1.msra.mxu0 %v1489
    %1543 = vmatprep.subr.mxu0 %v1494
    %1544 = vmatpush1.msra.mxu0 %v1493
    %1545 = vmatprep.subr.mxu0 %v1498
    %1546 = vmatpush1.msra.mxu0 %v1497
    %1547 = vmatprep.subr.mxu0 %v1502
    %1548 = vmatpush1.msra.mxu0 %v1501
    %1549 = vmatprep.subr.mxu0 %v1506
    %1550 = vmatpush1.msra.mxu0 %v1505
    %1551 = vmatprep.subr.mxu0 %v1510
    %1552 = vmatpush1.msra.mxu0 %v1509
    %1553 = vmatprep.subr.mxu0 %v1514
    %1554 = vmatpush1.msra.mxu0 %v1513
    %1555 = vmatprep.subr.mxu0 %v1518
    %1556 = vmatpush1.msra.mxu0 %v1517
    %1557 = vmatprep.subr.mxu0 %v1522
    %1558 = vmatpush1.msra.mxu0 %v1521
    %1559 = vmatprep.subr.mxu0 %v1526
    %1560 = vmatpush1.msra.mxu0 %v1525
    %1561 = vmatprep.subr.mxu0 0.0
    %1562 = vmatpush1.msra.mxu0 0.0
    %1563 = vmatprep.subr.mxu0 0.0
    %1564 = vmatpush1.msra.mxu0 0.0
    %1565 = vmatprep.subr.mxu0 0.0
    %1566 = vmatpush1.msra.mxu0 0.0
    %1567 = vmatprep.subr.mxu0 0.0
    %1568 = vmatpush1.msra.mxu0 0.0
    %1569 = vmatprep.subr.mxu0 0.0
    %1570 = vmatpush1.msra.mxu0 0.0
    %1571 = vmatprep.subr.mxu0 0.0
    %1572 = vmatpush1.msra.mxu0 0.0
    %1573 = vmatprep.subr.mxu0 0.0
    %1574 = vmatpush1.msra.mxu0 0.0
    %1575 = vmatprep.subr.mxu0 0.0
    %1576 = vmatpush1.msra.mxu0 0.0
    %1577 = vmatprep.subr.mxu0 0.0
    %1578 = vmatpush1.msra.mxu0 0.0
    %1579 = vmatprep.subr.mxu0 0.0
    %1580 = vmatpush1.msra.mxu0 0.0
    %1581 = vmatprep.subr.mxu0 0.0
    %1582 = vmatpush1.msra.mxu0 0.0
    %1583 = vmatprep.subr.mxu0 0.0
    %1584 = vmatpush1.msra.mxu0 0.0
    %1585 = vmatprep.subr.mxu0 0.0
    %1586 = vmatpush1.msra.mxu0 0.0
    %1587 = vmatprep.subr.mxu0 0.0
    %1588 = vmatpush1.msra.mxu0 0.0
    %1589 = vmatprep.subr.mxu0 0.0
    %1590 = vmatpush1.msra.mxu0 0.0
    %1591 = vmatprep.subr.mxu0 0.0
    %1592 = vmatpush1.msra.mxu0 0.0
    %1593 = vmatprep.mubr.f32.mxu0 0.0
    %1594 = vmatmul.mubr.f32.gmra.mrb[0].mxu0 %v988
    %v1595 = vpop.f32.mrb[0].mxu0
    %v1596 = vadd.f32 0.0, %v1595
    %v1597 = vpop.f32.mrb[0].mxu0
    %v1598 = vadd.f32 0.0, %v1597
    %1599 = vdwg.mxu0
    %1600 = vmatprep.subr.mxu0 %v1468
    %1601 = vmatpush1.msra.mxu0 %v1467
    %1602 = vmatprep.subr.mxu0 %v1472
    %1603 = vmatpush1.msra.mxu0 %v1471
    %1604 = vmatprep.subr.mxu0 %v1476
    %1605 = vmatpush1.msra.mxu0 %v1475
    %1606 = vmatprep.subr.mxu0 %v1480
    %1607 = vmatpush1.msra.mxu0 %v1479
    %1608 = vmatprep.subr.mxu0 %v1484
    %1609 = vmatpush1.msra.mxu0 %v1483
    %1610 = vmatprep.subr.mxu0 %v1488
    %1611 = vmatpush1.msra.mxu0 %v1487
    %1612 = vmatprep.subr.mxu0 %v1492
    %1613 = vmatpush1.msra.mxu0 %v1491
    %1614 = vmatprep.subr.mxu0 %v1496
    %1615 = vmatpush1.msra.mxu0 %v1495
    %1616 = vmatprep.subr.mxu0 %v1500
    %1617 = vmatpush1.msra.mxu0 %v1499
    %1618 = vmatprep.subr.mxu0 %v1504
    %1619 = vmatpush1.msra.mxu0 %v1503
    %1620 = vmatprep.subr.mxu0 %v1508
    %1621 = vmatpush1.msra.mxu0 %v1507
    %1622 = vmatprep.subr.mxu0 %v1512
    %1623 = vmatpush1.msra.mxu0 %v1511
    %1624 = vmatprep.subr.mxu0 %v1516
    %1625 = vmatpush1.msra.mxu0 %v1515
    %1626 = vmatprep.subr.mxu0 %v1520
    %1627 = vmatpush1.msra.mxu0 %v1519
    %1628 = vmatprep.subr.mxu0 %v1524
    %1629 = vmatpush1.msra.mxu0 %v1523
    %1630 = vmatprep.subr.mxu0 %v1528
    %1631 = vmatpush1.msra.mxu0 %v1527
    %1632 = vmatprep.subr.mxu0 0.0
    %1633 = vmatpush1.msra.mxu0 0.0
    %1634 = vmatprep.subr.mxu0 0.0
    %1635 = vmatpush1.msra.mxu0 0.0
    %1636 = vmatprep.subr.mxu0 0.0
    %1637 = vmatpush1.msra.mxu0 0.0
    %1638 = vmatprep.subr.mxu0 0.0
    %1639 = vmatpush1.msra.mxu0 0.0
    %1640 = vmatprep.subr.mxu0 0.0
    %1641 = vmatpush1.msra.mxu0 0.0
    %1642 = vmatprep.subr.mxu0 0.0
    %1643 = vmatpush1.msra.mxu0 0.0
    %1644 = vmatprep.subr.mxu0 0.0
    %1645 = vmatpush1.msra.mxu0 0.0
    %1646 = vmatprep.subr.mxu0 0.0
    %1647 = vmatpush1.msra.mxu0 0.0
    %1648 = vmatprep.subr.mxu0 0.0
    %1649 = vmatpush1.msra.mxu0 0.0
    %1650 = vmatprep.subr.mxu0 0.0
    %1651 = vmatpush1.msra.mxu0 0.0
    %1652 = vmatprep.subr.mxu0 0.0
    %1653 = vmatpush1.msra.mxu0 0.0
    %1654 = vmatprep.subr.mxu0 0.0
    %1655 = vmatpush1.msra.mxu0 0.0
    %1656 = vmatprep.subr.mxu0 0.0
    %1657 = vmatpush1.msra.mxu0 0.0
    %1658 = vmatprep.subr.mxu0 0.0
    %1659 = vmatpush1.msra.mxu0 0.0
    %1660 = vmatprep.subr.mxu0 0.0
    %1661 = vmatpush1.msra.mxu0 0.0
    %1662 = vmatprep.subr.mxu0 0.0
    %1663 = vmatpush1.msra.mxu0 0.0
    %1664 = vmatprep.mubr.f32.mxu0 0.0
    %1665 = vmatmul.mubr.f32.gmra.mrb[0].mxu0 %v988
    %v1666 = vpop.f32.mrb[0].mxu0
    %v1667 = vadd.f32 0.0, %v1666
    %v1668 = vpop.f32.mrb[0].mxu0
    %v1669 = vadd.f32 0.0, %v1668
    %1670 = vdwg.mxu0
    %1671 = vmatprep.subr.mxu0 %v1402
    %1672 = vmatpush1.msra.mxu0 %v1401
    %1673 = vmatprep.subr.mxu0 %v1406
    %1674 = vmatpush1.msra.mxu0 %v1405
    %1675 = vmatprep.subr.mxu0 %v1410
    %1676 = vmatpush1.msra.mxu0 %v1409
    %1677 = vmatprep.subr.mxu0 %v1414
    %1678 = vmatpush1.msra.mxu0 %v1413
    %1679 = vmatprep.subr.mxu0 %v1418
    %1680 = vmatpush1.msra.mxu0 %v1417
    %1681 = vmatprep.subr.mxu0 %v1422
    %1682 = vmatpush1.msra.mxu0 %v1421
    %1683 = vmatprep.subr.mxu0 %v1426
    %1684 = vmatpush1.msra.mxu0 %v1425
    %1685 = vmatprep.subr.mxu0 %v1430
    %1686 = vmatpush1.msra.mxu0 %v1429
    %1687 = vmatprep.subr.mxu0 %v1434
    %1688 = vmatpush1.msra.mxu0 %v1433
    %1689 = vmatprep.subr.mxu0 %v1438
    %1690 = vmatpush1.msra.mxu0 %v1437
    %1691 = vmatprep.subr.mxu0 %v1442
    %1692 = vmatpush1.msra.mxu0 %v1441
    %1693 = vmatprep.subr.mxu0 %v1446
    %1694 = vmatpush1.msra.mxu0 %v1445
    %1695 = vmatprep.subr.mxu0 %v1450
    %1696 = vmatpush1.msra.mxu0 %v1449
    %1697 = vmatprep.subr.mxu0 %v1454
    %1698 = vmatpush1.msra.mxu0 %v1453
    %1699 = vmatprep.subr.mxu0 %v1458
    %1700 = vmatpush1.msra.mxu0 %v1457
    %1701 = vmatprep.subr.mxu0 %v1462
    %1702 = vmatpush1.msra.mxu0 %v1461
    %1703 = vmatprep.subr.mxu0 0.0
    %1704 = vmatpush1.msra.mxu0 0.0
    %1705 = vmatprep.subr.mxu0 0.0
    %1706 = vmatpush1.msra.mxu0 0.0
    %1707 = vmatprep.subr.mxu0 0.0
    %1708 = vmatpush1.msra.mxu0 0.0
    %1709 = vmatprep.subr.mxu0 0.0
    %1710 = vmatpush1.msra.mxu0 0.0
    %1711 = vmatprep.subr.mxu0 0.0
    %1712 = vmatpush1.msra.mxu0 0.0
    %1713 = vmatprep.subr.mxu0 0.0
    %1714 = vmatpush1.msra.mxu0 0.0
    %1715 = vmatprep.subr.mxu0 0.0
    %1716 = vmatpush1.msra.mxu0 0.0
    %1717 = vmatprep.subr.mxu0 0.0
    %1718 = vmatpush1.msra.mxu0 0.0
    %1719 = vmatprep.subr.mxu0 0.0
    %1720 = vmatpush1.msra.mxu0 0.0
    %1721 = vmatprep.subr.mxu0 0.0
    %1722 = vmatpush1.msra.mxu0 0.0
    %1723 = vmatprep.subr.mxu0 0.0
    %1724 = vmatpush1.msra.mxu0 0.0
    %1725 = vmatprep.subr.mxu0 0.0
    %1726 = vmatpush1.msra.mxu0 0.0
    %1727 = vmatprep.subr.mxu0 0.0
    %1728 = vmatpush1.msra.mxu0 0.0
    %1729 = vmatprep.subr.mxu0 0.0
    %1730 = vmatpush1.msra.mxu0 0.0
    %1731 = vmatprep.subr.mxu0 0.0
    %1732 = vmatpush1.msra.mxu0 0.0
    %1733 = vmatprep.subr.mxu0 0.0
    %1734 = vmatpush1.msra.mxu0 0.0
    %1735 = vmatprep.mubr.f32.mxu0 0.0
    %1736 = vmatmul.mubr.f32.gmra.mrb[0].mxu0 %v497
    %v1737 = vpop.f32.mrb[0].mxu0
    %v1738 = vadd.f32 %v1596, %v1737
    %v1739 = vpop.f32.mrb[0].mxu0
    %v1740 = vadd.f32 %v1598, %v1739
    %1741 = vdwg.mxu0
    %1742 = vmatprep.subr.mxu0 %v1404
    %1743 = vmatpush1.msra.mxu0 %v1403
    %1744 = vmatprep.subr.mxu0 %v1408
    %1745 = vmatpush1.msra.mxu0 %v1407
    %1746 = vmatprep.subr.mxu0 %v1412
    %1747 = vmatpush1.msra.mxu0 %v1411
    %1748 = vmatprep.subr.mxu0 %v1416
    %1749 = vmatpush1.msra.mxu0 %v1415
    %1750 = vmatprep.subr.mxu0 %v1420
    %1751 = vmatpush1.msra.mxu0 %v1419
    %1752 = vmatprep.subr.mxu0 %v1424
    %1753 = vmatpush1.msra.mxu0 %v1423
    %1754 = vmatprep.subr.mxu0 %v1428
    %1755 = vmatpush1.msra.mxu0 %v1427
    %1756 = vmatprep.subr.mxu0 %v1432
    %1757 = vmatpush1.msra.mxu0 %v1431
    %1758 = vmatprep.subr.mxu0 %v1436
    %1759 = vmatpush1.msra.mxu0 %v1435
    %1760 = vmatprep.subr.mxu0 %v1440
    %1761 = vmatpush1.msra.mxu0 %v1439
    %1762 = vmatprep.subr.mxu0 %v1444
    %1763 = vmatpush1.msra.mxu0 %v1443
    %1764 = vmatprep.subr.mxu0 %v1448
    %1765 = vmatpush1.msra.mxu0 %v1447
    %1766 = vmatprep.subr.mxu0 %v1452
    %1767 = vmatpush1.msra.mxu0 %v1451
    %1768 = vmatprep.subr.mxu0 %v1456
    %1769 = vmatpush1.msra.mxu0 %v1455
    %1770 = vmatprep.subr.mxu0 %v1460
    %1771 = vmatpush1.msra.mxu0 %v1459
    %1772 = vmatprep.subr.mxu0 %v1464
    %1773 = vmatpush1.msra.mxu0 %v1463
    %1774 = vmatprep.subr.mxu0 0.0
    %1775 = vmatpush1.msra.mxu0 0.0
    %1776 = vmatprep.subr.mxu0 0.0
    %1777 = vmatpush1.msra.mxu0 0.0
    %1778 = vmatprep.subr.mxu0 0.0
    %1779 = vmatpush1.msra.mxu0 0.0
    %1780 = vmatprep.subr.mxu0 0.0
    %1781 = vmatpush1.msra.mxu0 0.0
    %1782 = vmatprep.subr.mxu0 0.0
    %1783 = vmatpush1.msra.mxu0 0.0
    %1784 = vmatprep.subr.mxu0 0.0
    %1785 = vmatpush1.msra.mxu0 0.0
    %1786 = vmatprep.subr.mxu0 0.0
    %1787 = vmatpush1.msra.mxu0 0.0
    %1788 = vmatprep.subr.mxu0 0.0
    %1789 = vmatpush1.msra.mxu0 0.0
    %1790 = vmatprep.subr.mxu0 0.0
    %1791 = vmatpush1.msra.mxu0 0.0
    %1792 = vmatprep.subr.mxu0 0.0
    %1793 = vmatpush1.msra.mxu0 0.0
    %1794 = vmatprep.subr.mxu0 0.0
    %1795 = vmatpush1.msra.mxu0 0.0
    %1796 = vmatprep.subr.mxu0 0.0
    %1797 = vmatpush1.msra.mxu0 0.0
    %1798 = vmatprep.subr.mxu0 0.0
    %1799 = vmatpush1.msra.mxu0 0.0
    %1800 = vmatprep.subr.mxu0 0.0
    %1801 = vmatpush1.msra.mxu0 0.0
    %1802 = vmatprep.subr.mxu0 0.0
    %1803 = vmatpush1.msra.mxu0 0.0
    %1804 = vmatprep.subr.mxu0 0.0
    %1805 = vmatpush1.msra.mxu0 0.0
    %1806 = vmatprep.mubr.f32.mxu0 0.0
    %1807 = vmatmul.mubr.f32.gmra.mrb[0].mxu0 %v497
    %v1808 = vpop.f32.mrb[0].mxu0
    %v1809 = vadd.f32 %v1667, %v1808
    %v1810 = vpop.f32.mrb[0].mxu0
    %v1811 = vadd.f32 %v1669, %v1810
    %1812 = vdwg.mxu0
    %v1813 = vmul.f32 %v1326, %v1738
    %v1814 = vmul.f32 %v1328, %v1740
    %v1815 = vmul.f32 %v1397, %v1809
    %v1816 = vmul.f32 %v1399, %v1811
    %v1817 = vld [vmem:[%s13] sm:$0xff]
    %v1818 = vld [vmem:[%s13 + $0x8] sm:$0xff]
    %v1819 = vld [vmem:[%s13 + $0x10] sm:$0xff]
    %v1820 = vld [vmem:[%s13 + $0x18] sm:$0xff]
    %v1821 = vld [vmem:[%s13 + $0x20] sm:$0xff]
    %v1822 = vld [vmem:[%s13 + $0x28] sm:$0xff]
    %v1823 = vld [vmem:[%s13 + $0x30] sm:$0xff]
    %v1824 = vld [vmem:[%s13 + $0x38] sm:$0xff]
    %v1825 = vld [vmem:[%s13 + $0x40] sm:$0xff]
    %v1826 = vld [vmem:[%s13 + $0x48] sm:$0xff]
    %v1827 = vld [vmem:[%s13 + $0x50] sm:$0xff]
    %v1828 = vld [vmem:[%s13 + $0x58] sm:$0xff]
    %v1829 = vld [vmem:[%s13 + $0x60] sm:$0xff]
    %v1830 = vld [vmem:[%s13 + $0x68] sm:$0xff]
    %v1831 = vld [vmem:[%s13 + $0x70] sm:$0xff]
    %v1832 = vld [vmem:[%s13 + $0x78] sm:$0xff]
    %v1833 = vld [vmem:[%s13 + $0x80] sm:$0xff]
    %v1834 = vld [vmem:[%s13 + $0x88] sm:$0xff]
    %v1835 = vld [vmem:[%s13 + $0x90] sm:$0xff]
    %v1836 = vld [vmem:[%s13 + $0x98] sm:$0xff]
    %v1837 = vld [vmem:[%s13 + $0xa0] sm:$0xff]
    %v1838 = vld [vmem:[%s13 + $0xa8] sm:$0xff]
    %v1839 = vld [vmem:[%s13 + $0xb0] sm:$0xff]
    %v1840 = vld [vmem:[%s13 + $0xb8] sm:$0xff]
    %v1841 = vld [vmem:[%s13 + $0xc0] sm:$0xff]
    %v1842 = vld [vmem:[%s13 + $0xc8] sm:$0xff]
    %v1843 = vld [vmem:[%s13 + $0xd0] sm:$0xff]
    %v1844 = vld [vmem:[%s13 + $0xd8] sm:$0xff]
    %v1845 = vld [vmem:[%s13 + $0xe0] sm:$0xff]
    %v1846 = vld [vmem:[%s13 + $0xe8] sm:$0xff]
    %v1847 = vld [vmem:[%s13 + $0xf0] sm:$0xff]
    %v1848 = vld [vmem:[%s13 + $0xf8] sm:$0xff]
    %v1849 = vld [vmem:[%s13 + $0x100] sm:$0xff]
    %v1850 = vld [vmem:[%s13 + $0x108] sm:$0xff]
    %v1851 = vld [vmem:[%s13 + $0x110] sm:$0xff]
    %v1852 = vld [vmem:[%s13 + $0x118] sm:$0xff]
    %v1853 = vld [vmem:[%s13 + $0x120] sm:$0xff]
    %v1854 = vld [vmem:[%s13 + $0x128] sm:$0xff]
    %v1855 = vld [vmem:[%s13 + $0x130] sm:$0xff]
    %v1856 = vld [vmem:[%s13 + $0x138] sm:$0xff]
    %v1857 = vld [vmem:[%s13 + $0x140] sm:$0xff]
    %v1858 = vld [vmem:[%s13 + $0x148] sm:$0xff]
    %v1859 = vld [vmem:[%s13 + $0x150] sm:$0xff]
    %v1860 = vld [vmem:[%s13 + $0x158] sm:$0xff]
    %v1861 = vld [vmem:[%s13 + $0x160] sm:$0xff]
    %v1862 = vld [vmem:[%s13 + $0x168] sm:$0xff]
    %v1863 = vld [vmem:[%s13 + $0x170] sm:$0xff]
    %v1864 = vld [vmem:[%s13 + $0x178] sm:$0xff]
    %v1865 = vld [vmem:[%s13 + $0x180] sm:$0xff]
    %v1866 = vld [vmem:[%s13 + $0x188] sm:$0xff]
    %v1867 = vld [vmem:[%s13 + $0x190] sm:$0xff]
    %v1868 = vld [vmem:[%s13 + $0x198] sm:$0xff]
    %v1869 = vld [vmem:[%s13 + $0x1a0] sm:$0xff]
    %v1870 = vld [vmem:[%s13 + $0x1a8] sm:$0xff]
    %v1871 = vld [vmem:[%s13 + $0x1b0] sm:$0xff]
    %v1872 = vld [vmem:[%s13 + $0x1b8] sm:$0xff]
    %v1873 = vld [vmem:[%s13 + $0x1c0] sm:$0xff]
    %v1874 = vld [vmem:[%s13 + $0x1c8] sm:$0xff]
    %v1875 = vld [vmem:[%s13 + $0x1d0] sm:$0xff]
    %v1876 = vld [vmem:[%s13 + $0x1d8] sm:$0xff]
    %v1877 = vld [vmem:[%s13 + $0x1e0] sm:$0xff]
    %v1878 = vld [vmem:[%s13 + $0x1e8] sm:$0xff]
    %v1879 = vld [vmem:[%s13 + $0x1f0] sm:$0xff]
    %v1880 = vld [vmem:[%s13 + $0x1f8] sm:$0xff]
    %1881 = vmatprep.subr.mxu0 0.0
    %1882 = vmatpush1.msra.mxu0 %v1817
    %1883 = vmatprep.subr.mxu0 0.0
    %1884 = vmatpush1.msra.mxu0 %v1818
    %1885 = vmatprep.subr.mxu0 0.0
    %1886 = vmatpush1.msra.mxu0 %v1819
    %1887 = vmatprep.subr.mxu0 0.0
    %1888 = vmatpush1.msra.mxu0 %v1820
    %1889 = vmatprep.subr.mxu0 0.0
    %1890 = vmatpush1.msra.mxu0 %v1821
    %1891 = vmatprep.subr.mxu0 0.0
    %1892 = vmatpush1.msra.mxu0 %v1822
    %1893 = vmatprep.subr.mxu0 0.0
    %1894 = vmatpush1.msra.mxu0 %v1823
    %1895 = vmatprep.subr.mxu0 0.0
    %1896 = vmatpush1.msra.mxu0 %v1824
    %1897 = vmatprep.subr.mxu0 0.0
    %1898 = vmatpush1.msra.mxu0 %v1825
    %1899 = vmatprep.subr.mxu0 0.0
    %1900 = vmatpush1.msra.mxu0 %v1826
    %1901 = vmatprep.subr.mxu0 0.0
    %1902 = vmatpush1.msra.mxu0 %v1827
    %1903 = vmatprep.subr.mxu0 0.0
    %1904 = vmatpush1.msra.mxu0 %v1828
    %1905 = vmatprep.subr.mxu0 0.0
    %1906 = vmatpush1.msra.mxu0 %v1829
    %1907 = vmatprep.subr.mxu0 0.0
    %1908 = vmatpush1.msra.mxu0 %v1830
    %1909 = vmatprep.subr.mxu0 0.0
    %1910 = vmatpush1.msra.mxu0 %v1831
    %1911 = vmatprep.subr.mxu0 0.0
    %1912 = vmatpush1.msra.mxu0 %v1832
    %1913 = vmatprep.subr.mxu0 0.0
    %1914 = vmatpush1.msra.mxu0 %v1833
    %1915 = vmatprep.subr.mxu0 0.0
    %1916 = vmatpush1.msra.mxu0 %v1834
    %1917 = vmatprep.subr.mxu0 0.0
    %1918 = vmatpush1.msra.mxu0 %v1835
    %1919 = vmatprep.subr.mxu0 0.0
    %1920 = vmatpush1.msra.mxu0 %v1836
    %1921 = vmatprep.subr.mxu0 0.0
    %1922 = vmatpush1.msra.mxu0 %v1837
    %1923 = vmatprep.subr.mxu0 0.0
    %1924 = vmatpush1.msra.mxu0 %v1838
    %1925 = vmatprep.subr.mxu0 0.0
    %1926 = vmatpush1.msra.mxu0 %v1839
    %1927 = vmatprep.subr.mxu0 0.0
    %1928 = vmatpush1.msra.mxu0 %v1840
    %1929 = vmatprep.subr.mxu0 0.0
    %1930 = vmatpush1.msra.mxu0 %v1841
    %1931 = vmatprep.subr.mxu0 0.0
    %1932 = vmatpush1.msra.mxu0 %v1842
    %1933 = vmatprep.subr.mxu0 0.0
    %1934 = vmatpush1.msra.mxu0 %v1843
    %1935 = vmatprep.subr.mxu0 0.0
    %1936 = vmatpush1.msra.mxu0 %v1844
    %1937 = vmatprep.subr.mxu0 0.0
    %1938 = vmatpush1.msra.mxu0 %v1845
    %1939 = vmatprep.subr.mxu0 0.0
    %1940 = vmatpush1.msra.mxu0 %v1846
    %1941 = vmatprep.subr.mxu0 0.0
    %1942 = vmatpush1.msra.mxu0 %v1847
    %1943 = vmatprep.subr.mxu0 0.0
    %1944 = vmatpush1.msra.mxu0 %v1848
    %1945 = vmatprep.mubr.f32.mxu0 %v1814
    %1946 = vmatmul.mubr.f32.gmra.mrb[0].mxu0 %v1813
    %v1947 = vpop.f32.mrb[0].mxu0
    %v1948 = vadd.f32 0.0, %v1947
    %v1949 = vpop.f32.mrb[0].mxu0
    %1950 = vdwg.mxu0
    %1951 = vmatprep.subr.mxu0 0.0
    %1952 = vmatpush1.msra.mxu0 %v1849
    %1953 = vmatprep.subr.mxu0 0.0
    %1954 = vmatpush1.msra.mxu0 %v1850
    %1955 = vmatprep.subr.mxu0 0.0
    %1956 = vmatpush1.msra.mxu0 %v1851
    %1957 = vmatprep.subr.mxu0 0.0
    %1958 = vmatpush1.msra.mxu0 %v1852
    %1959 = vmatprep.subr.mxu0 0.0
    %1960 = vmatpush1.msra.mxu0 %v1853
    %1961 = vmatprep.subr.mxu0 0.0
    %1962 = vmatpush1.msra.mxu0 %v1854
    %1963 = vmatprep.subr.mxu0 0.0
    %1964 = vmatpush1.msra.mxu0 %v1855
    %1965 = vmatprep.subr.mxu0 0.0
    %1966 = vmatpush1.msra.mxu0 %v1856
    %1967 = vmatprep.subr.mxu0 0.0
    %1968 = vmatpush1.msra.mxu0 %v1857
    %1969 = vmatprep.subr.mxu0 0.0
    %1970 = vmatpush1.msra.mxu0 %v1858
    %1971 = vmatprep.subr.mxu0 0.0
    %1972 = vmatpush1.msra.mxu0 %v1859
    %1973 = vmatprep.subr.mxu0 0.0
    %1974 = vmatpush1.msra.mxu0 %v1860
    %1975 = vmatprep.subr.mxu0 0.0
    %1976 = vmatpush1.msra.mxu0 %v1861
    %1977 = vmatprep.subr.mxu0 0.0
    %1978 = vmatpush1.msra.mxu0 %v1862
    %1979 = vmatprep.subr.mxu0 0.0
    %1980 = vmatpush1.msra.mxu0 %v1863
    %1981 = vmatprep.subr.mxu0 0.0
    %1982 = vmatpush1.msra.mxu0 %v1864
    %1983 = vmatprep.subr.mxu0 0.0
    %1984 = vmatpush1.msra.mxu0 %v1865
    %1985 = vmatprep.subr.mxu0 0.0
    %1986 = vmatpush1.msra.mxu0 %v1866
    %1987 = vmatprep.subr.mxu0 0.0
    %1988 = vmatpush1.msra.mxu0 %v1867
    %1989 = vmatprep.subr.mxu0 0.0
    %1990 = vmatpush1.msra.mxu0 %v1868
    %1991 = vmatprep.subr.mxu0 0.0
    %1992 = vmatpush1.msra.mxu0 %v1869
    %1993 = vmatprep.subr.mxu0 0.0
    %1994 = vmatpush1.msra.mxu0 %v1870
    %1995 = vmatprep.subr.mxu0 0.0
    %1996 = vmatpush1.msra.mxu0 %v1871
    %1997 = vmatprep.subr.mxu0 0.0
    %1998 = vmatpush1.msra.mxu0 %v1872
    %1999 = vmatprep.subr.mxu0 0.0
    %2000 = vmatpush1.msra.mxu0 %v1873
    %2001 = vmatprep.subr.mxu0 0.0
    %2002 = vmatpush1.msra.mxu0 %v1874
    %2003 = vmatprep.subr.mxu0 0.0
    %2004 = vmatpush1.msra.mxu0 %v1875
    %2005 = vmatprep.subr.mxu0 0.0
    %2006 = vmatpush1.msra.mxu0 %v1876
    %2007 = vmatprep.subr.mxu0 0.0
    %2008 = vmatpush1.msra.mxu0 %v1877
    %2009 = vmatprep.subr.mxu0 0.0
    %2010 = vmatpush1.msra.mxu0 %v1878
    %2011 = vmatprep.subr.mxu0 0.0
    %2012 = vmatpush1.msra.mxu0 %v1879
    %2013 = vmatprep.subr.mxu0 0.0
    %2014 = vmatpush1.msra.mxu0 %v1880
    %2015 = vmatprep.mubr.f32.mxu0 %v1816
    %2016 = vmatmul.mubr.f32.gmra.mrb[0].mxu0 %v1815
    %v2017 = vpop.f32.mrb[0].mxu0
    %v2018 = vadd.f32 %v1948, %v2017
    %v2019 = vpop.f32.mrb[0].mxu0
    %2020 = vdwg.mxu0
    %v2021 = vtanh.pop %v2018
    %v2022 = vld [vmem:[%s14] sm:$0xff]
    %v2023 = vld [vmem:[%s14 + $0x8] sm:$0xff]
    %v2024 = vstv %s175
    %vm2025 = vcmask 130048
    %v2027 = vsel %vm2025, %v2021, 0
    %2029 = vmatprep.subr.mxu0 0.0
    %2030 = vmatpush1.msra.mxu0 %v2022
    %2031 = vmatprep.subr.mxu0 0.0
    %2032 = vmatpush1.msra.mxu0 %v2023
    %2033 = vmatprep.subr.mxu0 0.0
    %2034 = vmatpush1.msra.mxu0 0.0
    %2035 = vmatprep.subr.mxu0 0.0
    %2036 = vmatpush1.msra.mxu0 0.0
    %2037 = vmatprep.subr.mxu0 0.0
    %2038 = vmatpush1.msra.mxu0 0.0
    %2039 = vmatprep.subr.mxu0 0.0
    %2040 = vmatpush1.msra.mxu0 0.0
    %2041 = vmatprep.subr.mxu0 0.0
    %2042 = vmatpush1.msra.mxu0 0.0
    %2043 = vmatprep.subr.mxu0 0.0
    %2044 = vmatpush1.msra.mxu0 0.0
    %2045 = vmatprep.subr.mxu0 0.0
    %2046 = vmatpush1.msra.mxu0 0.0
    %2047 = vmatprep.subr.mxu0 0.0
    %2048 = vmatpush1.msra.mxu0 0.0
    %2049 = vmatprep.subr.mxu0 0.0
    %2050 = vmatpush1.msra.mxu0 0.0
    %2051 = vmatprep.subr.mxu0 0.0
    %2052 = vmatpush1.msra.mxu0 0.0
    %2053 = vmatprep.subr.mxu0 0.0
    %2054 = vmatpush1.msra.mxu0 0.0
    %2055 = vmatprep.subr.mxu0 0.0
    %2056 = vmatpush1.msra.mxu0 0.0
    %2057 = vmatprep.subr.mxu0 0.0
    %2058 = vmatpush1.msra.mxu0 0.0
    %2059 = vmatprep.subr.mxu0 0.0
    %2060 = vmatpush1.msra.mxu0 0.0
    %2061 = vmatprep.subr.mxu0 0.0
    %2062 = vmatpush1.msra.mxu0 0.0
    %2063 = vmatprep.subr.mxu0 0.0
    %2064 = vmatpush1.msra.mxu0 0.0
    %2065 = vmatprep.subr.mxu0 0.0
    %2066 = vmatpush1.msra.mxu0 0.0
    %2067 = vmatprep.subr.mxu0 0.0
    %2068 = vmatpush1.msra.mxu0 0.0
    %2069 = vmatprep.subr.mxu0 0.0
    %2070 = vmatpush1.msra.mxu0 0.0
    %2071 = vmatprep.subr.mxu0 0.0
    %2072 = vmatpush1.msra.mxu0 0.0
    %2073 = vmatprep.subr.mxu0 0.0
    %2074 = vmatpush1.msra.mxu0 0.0
    %2075 = vmatprep.subr.mxu0 0.0
    %2076 = vmatpush1.msra.mxu0 0.0
    %2077 = vmatprep.subr.mxu0 0.0
    %2078 = vmatpush1.msra.mxu0 0.0
    %2079 = vmatprep.subr.mxu0 0.0
    %2080 = vmatpush1.msra.mxu0 0.0
    %2081 = vmatprep.subr.mxu0 0.0
    %2082 = vmatpush1.msra.mxu0 0.0
    %2083 = vmatprep.subr.mxu0 0.0
    %2084 = vmatpush1.msra.mxu0 0.0
    %2085 = vmatprep.subr.mxu0 0.0
    %2086 = vmatpush1.msra.mxu0 0.0
    %2087 = vmatprep.subr.mxu0 0.0
    %2088 = vmatpush1.msra.mxu0 0.0
    %2089 = vmatprep.subr.mxu0 0.0
    %2090 = vmatpush1.msra.mxu0 0.0
    %2091 = vmatprep.subr.mxu0 0.0
    %2092 = vmatpush1.msra.mxu0 0.0
    %2093 = vmatprep.mubr.f32.mxu0 0.0
    %2094 = vmatmul.mubr.f32.gmra.mrb[0].mxu0 %v2027
    %v2095 = vpop.f32.mrb[0].mxu0
    %v2096 = vadd.f32 %v2024, %v2095
    %v2097 = vpop.f32.mrb[0].mxu0
    %2098 = vdwg.mxu0
    %vm2099 = vcmask 64512
    %2100 = vst.msk [vmem:[%s16] sm:$0xff] %vm2099, %v2096
    // Predicated region
    $region102: #{simple_link_deep_forward.1} parent=1 // pred_check
      _
    $region103: #{simple_link_deep_forward.1} parent=1 // pred_check_branch
      %2102 = sbr.rel (0) target = $region105
    $region104: #{simple_link_deep_forward.1} parent=1 // pred_region
      _
    $region105: #{simple_link_deep_forward.1} parent=1 // pred_fallthru
      _
    // Predicated region
    $region106: #{simple_link_deep_forward.1} parent=1 // pred_check
      _
    $region107: #{simple_link_deep_forward.1} parent=1 // pred_check_branch
      %2104 = sbr.rel (0) target = $region109
    $region108: #{simple_link_deep_forward.1} parent=1 // pred_region
      _
    $region109: #{simple_link_deep_forward.1} parent=1 // pred_fallthru
      _
    %2105 = vsyncpa [#allocation3], 1
    %2106 = vsyncpa [#allocation6], 1
    %2107 = vsyncpa [#allocation9], 1
    %2108 = vsyncpa [#allocation12], 1
    %2109 = vsyncpa [#allocation15], 1
    %2110 = vsyncpa [#allocation4], 1

</llo_original>
